<compile_context>
chip_gen: v6e
topology: v6e:2x2x1
jax: 0.10.0
libtpu: 0.0.40
codegen_flags: <defaults>
</compile_context>

<pallas_src>
import math

import numpy as np

import jax
import jax.numpy as jnp
from jax import lax
from jax.experimental import pallas as pl
from jax.experimental.pallas import tpu as pltpu

# ------------------------------------------------------------------
# Hyper-parameters (small, consistent with WordAttnNet.__init__)
# ------------------------------------------------------------------
VOCAB_LEN = 50
EMBED_DIMS = 16            # E
WORD_DIMS = 16             # H  (GRU hidden per direction / attention out_dim)
D_MODEL = 2 * WORD_DIMS    # D = 2H (bidirectional feature dim)
LN_EPS = 1e-5


# ==================================================================
# Single fused kernel: embedding -> biGRU -> LayerNorm -> attention
# ==================================================================
def fused_word_attn_kernel(ids_ref, emb_ref, wih_ref, bih_ref, whh_ref, bhh_ref,
                           ln_g_ref, ln_b_ref, wa_ref, ba_ref, wc_ref, bc_ref,
                           out_ref, score_ref):
    # ids_ref  : (T*B, 1) int32          emb_ref : (V, E)
    # wih_ref  : (E, 6H)   bih_ref : (1, 6H)   columns = [fwd r,z,n | bwd r,z,n]
    # whh_ref  : (2H, 6H) block-diagonal  bhh_ref : (1, 6H)
    # ln_g/ln_b: (1, D=2H)
    # wa_ref   : (D, H)    ba_ref : (1, H)     wc_ref : (1, H)   bc_ref : (1,1) SMEM
    # out_ref  : (T, D)    score_ref : (T, B)
    V, E = emb_ref.shape
    D = ln_g_ref.shape[1]
    H = D // 2
    T = out_ref.shape[0]
    B = score_ref.shape[1]
    TB = ids_ref.shape[0]
    f32 = jnp.float32

    # ---- embedding gather (one-hot matmul) fused with hoisted input projection
    ids = ids_ref[...]                                                   # (TB, 1)
    onehot = (lax.broadcasted_iota(jnp.int32, (TB, V), 1) == ids).astype(f32)
    x = jnp.dot(onehot, emb_ref[...], preferred_element_type=f32)        # (TB, E)
    xw = jnp.dot(x, wih_ref[...], preferred_element_type=f32) + bih_ref[...]  # (TB, 6H)

    whh = whh_ref[...]                                                   # (2H, 6H)
    bhh = bhh_ref[...]                                                   # (1, 6H)

    # ---- bidirectional GRU: both directions interleaved, fully unrolled
    h_f = jnp.zeros((B, H), f32)
    h_b = jnp.zeros((B, H), f32)
    hf_steps = [None] * T
    hb_steps = [None] * T
    for i in range(T):
        tf, tb = i, T - 1 - i
        h_cat = jnp.concatenate([h_f, h_b], axis=1)                      # (B, 2H)
        # one block-diagonal recurrent matmul for both directions (96 lanes)
        gh = jnp.dot(h_cat, whh, preferred_element_type=f32) + bhh       # (B, 6H)
        gxf = xw[tf * B:(tf + 1) * B, :]                                 # static slices
        gxb = xw[tb * B:(tb + 1) * B, :]
        # forward direction — PyTorch gate order r, z, n; b_hn stays inside r*(...)
        r_f = jax.nn.sigmoid(gxf[:, 0:H] + gh[:, 0:H])
        z_f = jax.nn.sigmoid(gxf[:, H:2 * H] + gh[:, H:2 * H])
        n_f = jnp.tanh(gxf[:, 2 * H:3 * H] + r_f * gh[:, 2 * H:3 * H])
        h_f = (1.0 - z_f) * n_f + z_f * h_f
        # backward direction
        r_b = jax.nn.sigmoid(gxb[:, 3 * H:4 * H] + gh[:, 3 * H:4 * H])
        z_b = jax.nn.sigmoid(gxb[:, 4 * H:5 * H] + gh[:, 4 * H:5 * H])
        n_b = jnp.tanh(gxb[:, 5 * H:6 * H] + r_b * gh[:, 5 * H:6 * H])
        h_b = (1.0 - z_b) * n_b + z_b * h_b
        hf_steps[tf] = h_f
        hb_steps[tb] = h_b

    # ---- GRU output as a lane-contiguous 2D slab (T*B, 2H); never touches HBM
    g2 = jnp.concatenate(
        [jnp.concatenate([hf_steps[t], hb_steps[t]], axis=1) for t in range(T)],
        axis=0)                                                          # (TB, D)

    # ---- LayerNorm over the feature (lane) axis
    mu = jnp.mean(g2, axis=-1, keepdims=True)
    var = jnp.mean(jnp.square(g2 - mu), axis=-1, keepdims=True)
    gn2 = (g2 - mu) * lax.rsqrt(var + LN_EPS) * ln_g_ref[...] + ln_b_ref[...]

    # ---- attention: tanh projection as one MXU matmul on the 2D slab
    a2 = jnp.tanh(jnp.dot(gn2, wa_ref[...], preferred_element_type=f32)
                  + ba_ref[...])                                         # (TB, H)

    # per-sentence views for the word-axis softmax / weighted sum
    gn3 = gn2.reshape(T, B, D)
    a3 = a2.reshape(T, B, H)
    # context logits: lane-reduce on VPU/XLU (intentionally NOT an N=1 MXU dot)
    logits = jnp.sum(a3 * wc_ref[...], axis=-1) + bc_ref[0, 0]           # (T, B)
    m = jnp.max(logits, axis=1, keepdims=True)
    e = jnp.exp(logits - m)
    score = e / jnp.sum(e, axis=1, keepdims=True)                        # softmax over W

    score_ref[...] = score
    out_ref[...] = jnp.sum(gn3 * score[:, :, None], axis=1)              # (T, D)


# ==================================================================
# Wrapper: weight packing + single pallas_call
# ==================================================================
def word_attn_net(input_ids, p):
    b, s, w = input_ids.shape
    T, B = b * s, w
    H, D = WORD_DIMS, D_MODEL

    # '(b s) w' token ids, flattened t-major / word-minor to match the (T, B) rows
    ids2 = input_ids.reshape(T * B, 1).astype(jnp.int32)

    # Pack GRU weights: output columns = [fwd r,z,n | bwd r,z,n], transposed for
    # (in, out)-oriented matmuls; recurrent weight is block-diagonal over [h_f|h_b].
    w_ih = jnp.concatenate([p["w_ih_f"].T, p["w_ih_b"].T], axis=1)          # (E, 6H)
    b_ih = jnp.concatenate([p["b_ih_f"], p["b_ih_b"]])[None, :]             # (1, 6H)
    zero = jnp.zeros((H, 3 * H), jnp.float32)
    w_hh = jnp.concatenate(
        [jnp.concatenate([p["w_hh_f"].T, zero], axis=1),
         jnp.concatenate([zero, p["w_hh_b"].T], axis=1)], axis=0)           # (2H, 6H)
    b_hh = jnp.concatenate([p["b_hh_f"], p["b_hh_b"]])[None, :]             # (1, 6H)

    vm = pl.BlockSpec(memory_space=pltpu.MemorySpace.VMEM)
    sm = pl.BlockSpec(memory_space=pltpu.MemorySpace.SMEM)

    # TODO(synk): nn.Dropout / GRU inter-layer dropout are training-time
    # stochastic ops; implemented as identity (eval semantics).
    out, score = pl.pallas_call(
        fused_word_attn_kernel,
        out_shape=(jax.ShapeDtypeStruct((T, D), jnp.float32),
                   jax.ShapeDtypeStruct((T, B), jnp.float32)),
        in_specs=[vm] * 11 + [sm],
        out_specs=(vm, vm),
    )(ids2, p["emb"], w_ih, b_ih, w_hh, b_hh,
      p["ln_g"][None, :], p["ln_b"][None, :],
      p["w_attn"].T, p["b_attn"][None, :],
      p["w_ctx"], p["b_ctx"].reshape(1, 1))

    words_embed = out.reshape(b, s, D)                                      # '(b s) d -> b s d'
    return words_embed, score


# ==================================================================
# Pure-JAX reference (correctness check of the fused kernel)
# ==================================================================
def reference_forward(input_ids, p):
    b, s, w = input_ids.shape
    x = p["emb"][input_ids.reshape(b * s, w)].astype(jnp.float32)

    def gru_dir(x, wih, whh, bih, bhh, reverse):
        H = whh.shape[1]

        def step(h, xt):
            xw = xt @ wih.T + bih
            hw = h @ whh.T + bhh
            r = jax.nn.sigmoid(xw[:, :H] + hw[:, :H])
            z = jax.nn.sigmoid(xw[:, H:2 * H] + hw[:, H:2 * H])
            n = jnp.tanh(xw[:, 2 * H:] + r * hw[:, 2 * H:])
            hn = (1.0 - z) * n + z * h
            return hn, hn

        h0 = jnp.zeros((x.shape[1], H), jnp.float32)
        _, ys = lax.scan(step, h0, x, reverse=reverse)
        return ys

    hf = gru_dir(x, p["w_ih_f"], p["w_hh_f"], p["b_ih_f"], p["b_hh_f"], False)
    hb = gru_dir(x, p["w_ih_b"], p["w_hh_b"], p["b_ih_b"], p["b_hh_b"], True)
    g = jnp.concatenate([hf, hb], axis=-1)

    mu = g.mean(-1, keepdims=True)
    var = ((g - mu) ** 2).mean(-1, keepdims=True)
    gn = (g - mu) / jnp.sqrt(var + LN_EPS) * p["ln_g"] + p["ln_b"]

    attn = jnp.tanh(gn @ p["w_attn"].T + p["b_attn"])
    logits = (attn @ p["w_ctx"].T)[..., 0] + p["b_ctx"][0]
    score = jax.nn.softmax(logits, axis=1)
    out = jnp.einsum("bnd,bn->bd", gn, score)
    return out.reshape(b, s, -1), score


# ==================================================================
# Deterministic parameter init (shapes follow the PyTorch __init__)
# ==================================================================
def init_params(key):
    H, E, D = WORD_DIMS, EMBED_DIMS, D_MODEL
    ks = jax.random.split(key, 13)

    def u(k, shape, fan):
        lim = 1.0 / math.sqrt(fan)
        return jax.random.uniform(k, shape, jnp.float32, -lim, lim)

    return {
        "emb":    jax.random.normal(ks[0], (VOCAB_LEN, E), jnp.float32),
        # GRU forward direction (PyTorch layout: (3H, E) / (3H, H), gate order r,z,n)
        "w_ih_f": u(ks[1], (3 * H, E), H),
        "w_hh_f": u(ks[2], (3 * H, H), H),
        "b_ih_f": u(ks[3], (3 * H,), H),
        "b_hh_f": u(ks[4], (3 * H,), H),
        # GRU backward direction
        "w_ih_b": u(ks[5], (3 * H, E), H),
        "w_hh_b": u(ks[6], (3 * H, H), H),
        "b_ih_b": u(ks[7], (3 * H,), H),
        "b_hh_b": u(ks[8], (3 * H,), H),
        # LayerNorm(2H)
        "ln_g":   jnp.ones((D,), jnp.float32),
        "ln_b":   jnp.zeros((D,), jnp.float32),
        # Attention: Linear(2H, H) and context Linear(H, 1)
        "w_attn": u(ks[9], (H, D), D),
        "b_attn": u(ks[10], (H,), D),
        "w_ctx":  u(ks[11], (1, H), H),
        "b_ctx":  u(ks[12], (1,), H),
    }


if __name__ == "__main__":
    key = jax.random.PRNGKey(0)
    kp, ki = jax.random.split(key)
    params = init_params(kp)

    b, s, w = 2, 4, 8
    input_ids = jax.random.randint(ki, (b, s, w), 0, VOCAB_LEN, dtype=jnp.int32)

    words_embed, words_attn = jax.jit(word_attn_net)(input_ids, params)
    jax.block_until_ready((words_embed, words_attn))

    assert words_embed.shape == (b, s, D_MODEL)
    assert words_attn.shape == (b * s, w)

    ref_embed, ref_attn = reference_forward(input_ids, params)
    np.testing.assert_allclose(np.asarray(words_embed), np.asarray(ref_embed),
                               rtol=1e-4, atol=1e-4)
    np.testing.assert_allclose(np.asarray(words_attn), np.asarray(ref_attn),
                               rtol=1e-4, atol=1e-4)

    print("KERNEL_OK")
</pallas_src>

<mosaic_0001>
module attributes {stable_mosaic.version = 11 : i64} {
  func.func @fused_word_attn_kernel(%arg0: memref<64x1xi32, #tpu.memory_space<vmem>>, %arg1: memref<50x16xf32, #tpu.memory_space<vmem>>, %arg2: memref<16x96xf32, #tpu.memory_space<vmem>>, %arg3: memref<1x96xf32, #tpu.memory_space<vmem>>, %arg4: memref<32x96xf32, #tpu.memory_space<vmem>>, %arg5: memref<1x96xf32, #tpu.memory_space<vmem>>, %arg6: memref<1x32xf32, #tpu.memory_space<vmem>>, %arg7: memref<1x32xf32, #tpu.memory_space<vmem>>, %arg8: memref<32x16xf32, #tpu.memory_space<vmem>>, %arg9: memref<1x16xf32, #tpu.memory_space<vmem>>, %arg10: memref<1x16xf32, #tpu.memory_space<vmem>>, %arg11: memref<1x1xf32, #tpu.memory_space<smem>>, %arg12: memref<8x32xf32, #tpu.memory_space<vmem>>, %arg13: memref<8x8xf32, #tpu.memory_space<vmem>>) attributes {dimension_semantics = [], scalar_prefetch = 0 : i64, scratch_operands = 0 : i64, tpu.core_type = #tpu.core_type<tc>} {
    %c0 = arith.constant 0 : index
    %c0_0 = arith.constant 0 : index
    %0 = vector.load %arg0[%c0, %c0_0] : memref<64x1xi32, #tpu.memory_space<vmem>>, vector<64x1xi32>
    %1 = tpu.iota {dimensions = array<i32: 1>} : vector<64x50xi32>
    %2 = vector.broadcast %0 : vector<64x1xi32> to vector<64x50xi32>
    %3 = arith.cmpi eq, %1, %2 : vector<64x50xi32>
    %4 = arith.extui %3 : vector<64x50xi1> to vector<64x50xi32>
    %5 = arith.sitofp %4 : vector<64x50xi32> to vector<64x50xf32>
    %c0_1 = arith.constant 0 : index
    %c0_2 = arith.constant 0 : index
    %6 = vector.load %arg1[%c0_1, %c0_2] : memref<50x16xf32, #tpu.memory_space<vmem>>, vector<50x16xf32>
    %cst = arith.constant dense<0.000000e+00> : vector<64x16xf32>
    %7 = tpu.matmul %5, %6, %cst {dimension_numbers = #tpu.dot_dimension_numbers<[1], [0], [0], [1], [0, 0, 1, 1], [], []>} : vector<64x50xf32>, vector<50x16xf32>, vector<64x16xf32> -> vector<64x16xf32>
    %c0_3 = arith.constant 0 : index
    %c0_4 = arith.constant 0 : index
    %8 = vector.load %arg2[%c0_3, %c0_4] : memref<16x96xf32, #tpu.memory_space<vmem>>, vector<16x96xf32>
    %cst_5 = arith.constant dense<0.000000e+00> : vector<64x96xf32>
    %9 = tpu.matmul %7, %8, %cst_5 {dimension_numbers = #tpu.dot_dimension_numbers<[1], [0], [0], [1], [0, 0, 1, 1], [], []>} : vector<64x16xf32>, vector<16x96xf32>, vector<64x96xf32> -> vector<64x96xf32>
    %c0_6 = arith.constant 0 : index
    %c0_7 = arith.constant 0 : index
    %10 = vector.load %arg3[%c0_6, %c0_7] : memref<1x96xf32, #tpu.memory_space<vmem>>, vector<1x96xf32>
    %11 = vector.broadcast %10 : vector<1x96xf32> to vector<64x96xf32>
    %12 = arith.addf %9, %11 : vector<64x96xf32>
    %c0_8 = arith.constant 0 : index
    %c0_9 = arith.constant 0 : index
    %13 = vector.load %arg4[%c0_8, %c0_9] : memref<32x96xf32, #tpu.memory_space<vmem>>, vector<32x96xf32>
    %c0_10 = arith.constant 0 : index
    %c0_11 = arith.constant 0 : index
    %14 = vector.load %arg5[%c0_10, %c0_11] : memref<1x96xf32, #tpu.memory_space<vmem>>, vector<1x96xf32>
    %cst_12 = arith.constant 0.000000e+00 : f32
    %15 = vector.broadcast %cst_12 : f32 to vector<8x16xf32>
    %cst_13 = arith.constant 0.000000e+00 : f32
    %16 = vector.broadcast %cst_13 : f32 to vector<8x16xf32>
    %17 = tpu.concatenate %15, %16 in 1 : vector<8x16xf32>, vector<8x16xf32> -> vector<8x32xf32>
    %cst_14 = arith.constant dense<0.000000e+00> : vector<8x96xf32>
    %18 = tpu.matmul %17, %13, %cst_14 {dimension_numbers = #tpu.dot_dimension_numbers<[1], [0], [0], [1], [0, 0, 1, 1], [], []>} : vector<8x32xf32>, vector<32x96xf32>, vector<8x96xf32> -> vector<8x96xf32>
    %19 = vector.broadcast %14 : vector<1x96xf32> to vector<8x96xf32>
    %20 = arith.addf %18, %19 : vector<8x96xf32>
    %21 = vector.extract_strided_slice %12 {offsets = [0, 0], sizes = [8, 96], strides = [1, 1]} : vector<64x96xf32> to vector<8x96xf32>
    %22 = vector.extract_strided_slice %12 {offsets = [56, 0], sizes = [8, 96], strides = [1, 1]} : vector<64x96xf32> to vector<8x96xf32>
    %23 = vector.extract_strided_slice %21 {offsets = [0, 0], sizes = [8, 16], strides = [1, 1]} : vector<8x96xf32> to vector<8x16xf32>
    %24 = vector.extract_strided_slice %20 {offsets = [0, 0], sizes = [8, 16], strides = [1, 1]} : vector<8x96xf32> to vector<8x16xf32>
    %25 = arith.addf %23, %24 : vector<8x16xf32>
    %26 = arith.negf %25 : vector<8x16xf32>
    %27 = math.exp %26 : vector<8x16xf32>
    %cst_15 = arith.constant 1.000000e+00 : f32
    %28 = vector.broadcast %cst_15 : f32 to vector<8x16xf32>
    %29 = arith.addf %28, %27 : vector<8x16xf32>
    %30 = arith.divf %28, %29 : vector<8x16xf32>
    %31 = vector.extract_strided_slice %21 {offsets = [0, 16], sizes = [8, 16], strides = [1, 1]} : vector<8x96xf32> to vector<8x16xf32>
    %32 = vector.extract_strided_slice %20 {offsets = [0, 16], sizes = [8, 16], strides = [1, 1]} : vector<8x96xf32> to vector<8x16xf32>
    %33 = arith.addf %31, %32 : vector<8x16xf32>
    %34 = arith.negf %33 : vector<8x16xf32>
    %35 = math.exp %34 : vector<8x16xf32>
    %cst_16 = arith.constant 1.000000e+00 : f32
    %36 = vector.broadcast %cst_16 : f32 to vector<8x16xf32>
    %37 = arith.addf %36, %35 : vector<8x16xf32>
    %38 = arith.divf %36, %37 : vector<8x16xf32>
    %39 = vector.extract_strided_slice %21 {offsets = [0, 32], sizes = [8, 16], strides = [1, 1]} : vector<8x96xf32> to vector<8x16xf32>
    %40 = vector.extract_strided_slice %20 {offsets = [0, 32], sizes = [8, 16], strides = [1, 1]} : vector<8x96xf32> to vector<8x16xf32>
    %41 = arith.mulf %30, %40 : vector<8x16xf32>
    %42 = arith.addf %39, %41 : vector<8x16xf32>
    %43 = math.tanh %42 : vector<8x16xf32>
    %cst_17 = arith.constant 1.000000e+00 : f32
    %44 = vector.broadcast %cst_17 : f32 to vector<8x16xf32>
    %45 = arith.subf %44, %38 : vector<8x16xf32>
    %46 = arith.mulf %45, %43 : vector<8x16xf32>
    %47 = arith.mulf %38, %15 : vector<8x16xf32>
    %48 = arith.addf %46, %47 : vector<8x16xf32>
    %49 = vector.extract_strided_slice %22 {offsets = [0, 48], sizes = [8, 16], strides = [1, 1]} : vector<8x96xf32> to vector<8x16xf32>
    %50 = vector.extract_strided_slice %20 {offsets = [0, 48], sizes = [8, 16], strides = [1, 1]} : vector<8x96xf32> to vector<8x16xf32>
    %51 = arith.addf %49, %50 : vector<8x16xf32>
    %52 = arith.negf %51 : vector<8x16xf32>
    %53 = math.exp %52 : vector<8x16xf32>
    %cst_18 = arith.constant 1.000000e+00 : f32
    %54 = vector.broadcast %cst_18 : f32 to vector<8x16xf32>
    %55 = arith.addf %54, %53 : vector<8x16xf32>
    %56 = arith.divf %54, %55 : vector<8x16xf32>
    %57 = vector.extract_strided_slice %22 {offsets = [0, 64], sizes = [8, 16], strides = [1, 1]} : vector<8x96xf32> to vector<8x16xf32>
    %58 = vector.extract_strided_slice %20 {offsets = [0, 64], sizes = [8, 16], strides = [1, 1]} : vector<8x96xf32> to vector<8x16xf32>
    %59 = arith.addf %57, %58 : vector<8x16xf32>
    %60 = arith.negf %59 : vector<8x16xf32>
    %61 = math.exp %60 : vector<8x16xf32>
    %cst_19 = arith.constant 1.000000e+00 : f32
    %62 = vector.broadcast %cst_19 : f32 to vector<8x16xf32>
    %63 = arith.addf %62, %61 : vector<8x16xf32>
    %64 = arith.divf %62, %63 : vector<8x16xf32>
    %65 = vector.extract_strided_slice %22 {offsets = [0, 80], sizes = [8, 16], strides = [1, 1]} : vector<8x96xf32> to vector<8x16xf32>
    %66 = vector.extract_strided_slice %20 {offsets = [0, 80], sizes = [8, 16], strides = [1, 1]} : vector<8x96xf32> to vector<8x16xf32>
    %67 = arith.mulf %56, %66 : vector<8x16xf32>
    %68 = arith.addf %65, %67 : vector<8x16xf32>
    %69 = math.tanh %68 : vector<8x16xf32>
    %cst_20 = arith.constant 1.000000e+00 : f32
    %70 = vector.broadcast %cst_20 : f32 to vector<8x16xf32>
    %71 = arith.subf %70, %64 : vector<8x16xf32>
    %72 = arith.mulf %71, %69 : vector<8x16xf32>
    %73 = arith.mulf %64, %16 : vector<8x16xf32>
    %74 = arith.addf %72, %73 : vector<8x16xf32>
    %75 = tpu.concatenate %48, %74 in 1 : vector<8x16xf32>, vector<8x16xf32> -> vector<8x32xf32>
    %cst_21 = arith.constant dense<0.000000e+00> : vector<8x96xf32>
    %76 = tpu.matmul %75, %13, %cst_21 {dimension_numbers = #tpu.dot_dimension_numbers<[1], [0], [0], [1], [0, 0, 1, 1], [], []>} : vector<8x32xf32>, vector<32x96xf32>, vector<8x96xf32> -> vector<8x96xf32>
    %77 = vector.broadcast %14 : vector<1x96xf32> to vector<8x96xf32>
    %78 = arith.addf %76, %77 : vector<8x96xf32>
    %79 = vector.extract_strided_slice %12 {offsets = [8, 0], sizes = [8, 96], strides = [1, 1]} : vector<64x96xf32> to vector<8x96xf32>
    %80 = vector.extract_strided_slice %12 {offsets = [48, 0], sizes = [8, 96], strides = [1, 1]} : vector<64x96xf32> to vector<8x96xf32>
    %81 = vector.extract_strided_slice %79 {offsets = [0, 0], sizes = [8, 16], strides = [1, 1]} : vector<8x96xf32> to vector<8x16xf32>
    %82 = vector.extract_strided_slice %78 {offsets = [0, 0], sizes = [8, 16], strides = [1, 1]} : vector<8x96xf32> to vector<8x16xf32>
    %83 = arith.addf %81, %82 : vector<8x16xf32>
    %84 = arith.negf %83 : vector<8x16xf32>
    %85 = math.exp %84 : vector<8x16xf32>
    %cst_22 = arith.constant 1.000000e+00 : f32
    %86 = vector.broadcast %cst_22 : f32 to vector<8x16xf32>
    %87 = arith.addf %86, %85 : vector<8x16xf32>
    %88 = arith.divf %86, %87 : vector<8x16xf32>
    %89 = vector.extract_strided_slice %79 {offsets = [0, 16], sizes = [8, 16], strides = [1, 1]} : vector<8x96xf32> to vector<8x16xf32>
    %90 = vector.extract_strided_slice %78 {offsets = [0, 16], sizes = [8, 16], strides = [1, 1]} : vector<8x96xf32> to vector<8x16xf32>
    %91 = arith.addf %89, %90 : vector<8x16xf32>
    %92 = arith.negf %91 : vector<8x16xf32>
    %93 = math.exp %92 : vector<8x16xf32>
    %cst_23 = arith.constant 1.000000e+00 : f32
    %94 = vector.broadcast %cst_23 : f32 to vector<8x16xf32>
    %95 = arith.addf %94, %93 : vector<8x16xf32>
    %96 = arith.divf %94, %95 : vector<8x16xf32>
    %97 = vector.extract_strided_slice %79 {offsets = [0, 32], sizes = [8, 16], strides = [1, 1]} : vector<8x96xf32> to vector<8x16xf32>
    %98 = vector.extract_strided_slice %78 {offsets = [0, 32], sizes = [8, 16], strides = [1, 1]} : vector<8x96xf32> to vector<8x16xf32>
    %99 = arith.mulf %88, %98 : vector<8x16xf32>
    %100 = arith.addf %97, %99 : vector<8x16xf32>
    %101 = math.tanh %100 : vector<8x16xf32>
    %cst_24 = arith.constant 1.000000e+00 : f32
    %102 = vector.broadcast %cst_24 : f32 to vector<8x16xf32>
    %103 = arith.subf %102, %96 : vector<8x16xf32>
    %104 = arith.mulf %103, %101 : vector<8x16xf32>
    %105 = arith.mulf %96, %48 : vector<8x16xf32>
    %106 = arith.addf %104, %105 : vector<8x16xf32>
    %107 = vector.extract_strided_slice %80 {offsets = [0, 48], sizes = [8, 16], strides = [1, 1]} : vector<8x96xf32> to vector<8x16xf32>
    %108 = vector.extract_strided_slice %78 {offsets = [0, 48], sizes = [8, 16], strides = [1, 1]} : vector<8x96xf32> to vector<8x16xf32>
    %109 = arith.addf %107, %108 : vector<8x16xf32>
    %110 = arith.negf %109 : vector<8x16xf32>
    %111 = math.exp %110 : vector<8x16xf32>
    %cst_25 = arith.constant 1.000000e+00 : f32
    %112 = vector.broadcast %cst_25 : f32 to vector<8x16xf32>
    %113 = arith.addf %112, %111 : vector<8x16xf32>
    %114 = arith.divf %112, %113 : vector<8x16xf32>
    %115 = vector.extract_strided_slice %80 {offsets = [0, 64], sizes = [8, 16], strides = [1, 1]} : vector<8x96xf32> to vector<8x16xf32>
    %116 = vector.extract_strided_slice %78 {offsets = [0, 64], sizes = [8, 16], strides = [1, 1]} : vector<8x96xf32> to vector<8x16xf32>
    %117 = arith.addf %115, %116 : vector<8x16xf32>
    %118 = arith.negf %117 : vector<8x16xf32>
    %119 = math.exp %118 : vector<8x16xf32>
    %cst_26 = arith.constant 1.000000e+00 : f32
    %120 = vector.broadcast %cst_26 : f32 to vector<8x16xf32>
    %121 = arith.addf %120, %119 : vector<8x16xf32>
    %122 = arith.divf %120, %121 : vector<8x16xf32>
    %123 = vector.extract_strided_slice %80 {offsets = [0, 80], sizes = [8, 16], strides = [1, 1]} : vector<8x96xf32> to vector<8x16xf32>
    %124 = vector.extract_strided_slice %78 {offsets = [0, 80], sizes = [8, 16], strides = [1, 1]} : vector<8x96xf32> to vector<8x16xf32>
    %125 = arith.mulf %114, %124 : vector<8x16xf32>
    %126 = arith.addf %123, %125 : vector<8x16xf32>
    %127 = math.tanh %126 : vector<8x16xf32>
    %cst_27 = arith.constant 1.000000e+00 : f32
    %128 = vector.broadcast %cst_27 : f32 to vector<8x16xf32>
    %129 = arith.subf %128, %122 : vector<8x16xf32>
    %130 = arith.mulf %129, %127 : vector<8x16xf32>
    %131 = arith.mulf %122, %74 : vector<8x16xf32>
    %132 = arith.addf %130, %131 : vector<8x16xf32>
    %133 = tpu.concatenate %106, %132 in 1 : vector<8x16xf32>, vector<8x16xf32> -> vector<8x32xf32>
    %cst_28 = arith.constant dense<0.000000e+00> : vector<8x96xf32>
    %134 = tpu.matmul %133, %13, %cst_28 {dimension_numbers = #tpu.dot_dimension_numbers<[1], [0], [0], [1], [0, 0, 1, 1], [], []>} : vector<8x32xf32>, vector<32x96xf32>, vector<8x96xf32> -> vector<8x96xf32>
    %135 = vector.broadcast %14 : vector<1x96xf32> to vector<8x96xf32>
    %136 = arith.addf %134, %135 : vector<8x96xf32>
    %137 = vector.extract_strided_slice %12 {offsets = [16, 0], sizes = [8, 96], strides = [1, 1]} : vector<64x96xf32> to vector<8x96xf32>
    %138 = vector.extract_strided_slice %12 {offsets = [40, 0], sizes = [8, 96], strides = [1, 1]} : vector<64x96xf32> to vector<8x96xf32>
    %139 = vector.extract_strided_slice %137 {offsets = [0, 0], sizes = [8, 16], strides = [1, 1]} : vector<8x96xf32> to vector<8x16xf32>
    %140 = vector.extract_strided_slice %136 {offsets = [0, 0], sizes = [8, 16], strides = [1, 1]} : vector<8x96xf32> to vector<8x16xf32>
    %141 = arith.addf %139, %140 : vector<8x16xf32>
    %142 = arith.negf %141 : vector<8x16xf32>
    %143 = math.exp %142 : vector<8x16xf32>
    %cst_29 = arith.constant 1.000000e+00 : f32
    %144 = vector.broadcast %cst_29 : f32 to vector<8x16xf32>
    %145 = arith.addf %144, %143 : vector<8x16xf32>
    %146 = arith.divf %144, %145 : vector<8x16xf32>
    %147 = vector.extract_strided_slice %137 {offsets = [0, 16], sizes = [8, 16], strides = [1, 1]} : vector<8x96xf32> to vector<8x16xf32>
    %148 = vector.extract_strided_slice %136 {offsets = [0, 16], sizes = [8, 16], strides = [1, 1]} : vector<8x96xf32> to vector<8x16xf32>
    %149 = arith.addf %147, %148 : vector<8x16xf32>
    %150 = arith.negf %149 : vector<8x16xf32>
    %151 = math.exp %150 : vector<8x16xf32>
    %cst_30 = arith.constant 1.000000e+00 : f32
    %152 = vector.broadcast %cst_30 : f32 to vector<8x16xf32>
    %153 = arith.addf %152, %151 : vector<8x16xf32>
    %154 = arith.divf %152, %153 : vector<8x16xf32>
    %155 = vector.extract_strided_slice %137 {offsets = [0, 32], sizes = [8, 16], strides = [1, 1]} : vector<8x96xf32> to vector<8x16xf32>
    %156 = vector.extract_strided_slice %136 {offsets = [0, 32], sizes = [8, 16], strides = [1, 1]} : vector<8x96xf32> to vector<8x16xf32>
    %157 = arith.mulf %146, %156 : vector<8x16xf32>
    %158 = arith.addf %155, %157 : vector<8x16xf32>
    %159 = math.tanh %158 : vector<8x16xf32>
    %cst_31 = arith.constant 1.000000e+00 : f32
    %160 = vector.broadcast %cst_31 : f32 to vector<8x16xf32>
    %161 = arith.subf %160, %154 : vector<8x16xf32>
    %162 = arith.mulf %161, %159 : vector<8x16xf32>
    %163 = arith.mulf %154, %106 : vector<8x16xf32>
    %164 = arith.addf %162, %163 : vector<8x16xf32>
    %165 = vector.extract_strided_slice %138 {offsets = [0, 48], sizes = [8, 16], strides = [1, 1]} : vector<8x96xf32> to vector<8x16xf32>
    %166 = vector.extract_strided_slice %136 {offsets = [0, 48], sizes = [8, 16], strides = [1, 1]} : vector<8x96xf32> to vector<8x16xf32>
    %167 = arith.addf %165, %166 : vector<8x16xf32>
    %168 = arith.negf %167 : vector<8x16xf32>
    %169 = math.exp %168 : vector<8x16xf32>
    %cst_32 = arith.constant 1.000000e+00 : f32
    %170 = vector.broadcast %cst_32 : f32 to vector<8x16xf32>
    %171 = arith.addf %170, %169 : vector<8x16xf32>
    %172 = arith.divf %170, %171 : vector<8x16xf32>
    %173 = vector.extract_strided_slice %138 {offsets = [0, 64], sizes = [8, 16], strides = [1, 1]} : vector<8x96xf32> to vector<8x16xf32>
    %174 = vector.extract_strided_slice %136 {offsets = [0, 64], sizes = [8, 16], strides = [1, 1]} : vector<8x96xf32> to vector<8x16xf32>
    %175 = arith.addf %173, %174 : vector<8x16xf32>
    %176 = arith.negf %175 : vector<8x16xf32>
    %177 = math.exp %176 : vector<8x16xf32>
    %cst_33 = arith.constant 1.000000e+00 : f32
    %178 = vector.broadcast %cst_33 : f32 to vector<8x16xf32>
    %179 = arith.addf %178, %177 : vector<8x16xf32>
    %180 = arith.divf %178, %179 : vector<8x16xf32>
    %181 = vector.extract_strided_slice %138 {offsets = [0, 80], sizes = [8, 16], strides = [1, 1]} : vector<8x96xf32> to vector<8x16xf32>
    %182 = vector.extract_strided_slice %136 {offsets = [0, 80], sizes = [8, 16], strides = [1, 1]} : vector<8x96xf32> to vector<8x16xf32>
    %183 = arith.mulf %172, %182 : vector<8x16xf32>
    %184 = arith.addf %181, %183 : vector<8x16xf32>
    %185 = math.tanh %184 : vector<8x16xf32>
    %cst_34 = arith.constant 1.000000e+00 : f32
    %186 = vector.broadcast %cst_34 : f32 to vector<8x16xf32>
    %187 = arith.subf %186, %180 : vector<8x16xf32>
    %188 = arith.mulf %187, %185 : vector<8x16xf32>
    %189 = arith.mulf %180, %132 : vector<8x16xf32>
    %190 = arith.addf %188, %189 : vector<8x16xf32>
    %191 = tpu.concatenate %164, %190 in 1 : vector<8x16xf32>, vector<8x16xf32> -> vector<8x32xf32>
    %cst_35 = arith.constant dense<0.000000e+00> : vector<8x96xf32>
    %192 = tpu.matmul %191, %13, %cst_35 {dimension_numbers = #tpu.dot_dimension_numbers<[1], [0], [0], [1], [0, 0, 1, 1], [], []>} : vector<8x32xf32>, vector<32x96xf32>, vector<8x96xf32> -> vector<8x96xf32>
    %193 = vector.broadcast %14 : vector<1x96xf32> to vector<8x96xf32>
    %194 = arith.addf %192, %193 : vector<8x96xf32>
    %195 = vector.extract_strided_slice %12 {offsets = [24, 0], sizes = [8, 96], strides = [1, 1]} : vector<64x96xf32> to vector<8x96xf32>
    %196 = vector.extract_strided_slice %12 {offsets = [32, 0], sizes = [8, 96], strides = [1, 1]} : vector<64x96xf32> to vector<8x96xf32>
    %197 = vector.extract_strided_slice %195 {offsets = [0, 0], sizes = [8, 16], strides = [1, 1]} : vector<8x96xf32> to vector<8x16xf32>
    %198 = vector.extract_strided_slice %194 {offsets = [0, 0], sizes = [8, 16], strides = [1, 1]} : vector<8x96xf32> to vector<8x16xf32>
    %199 = arith.addf %197, %198 : vector<8x16xf32>
    %200 = arith.negf %199 : vector<8x16xf32>
    %201 = math.exp %200 : vector<8x16xf32>
    %cst_36 = arith.constant 1.000000e+00 : f32
    %202 = vector.broadcast %cst_36 : f32 to vector<8x16xf32>
    %203 = arith.addf %202, %201 : vector<8x16xf32>
    %204 = arith.divf %202, %203 : vector<8x16xf32>
    %205 = vector.extract_strided_slice %195 {offsets = [0, 16], sizes = [8, 16], strides = [1, 1]} : vector<8x96xf32> to vector<8x16xf32>
    %206 = vector.extract_strided_slice %194 {offsets = [0, 16], sizes = [8, 16], strides = [1, 1]} : vector<8x96xf32> to vector<8x16xf32>
    %207 = arith.addf %205, %206 : vector<8x16xf32>
    %208 = arith.negf %207 : vector<8x16xf32>
    %209 = math.exp %208 : vector<8x16xf32>
    %cst_37 = arith.constant 1.000000e+00 : f32
    %210 = vector.broadcast %cst_37 : f32 to vector<8x16xf32>
    %211 = arith.addf %210, %209 : vector<8x16xf32>
    %212 = arith.divf %210, %211 : vector<8x16xf32>
    %213 = vector.extract_strided_slice %195 {offsets = [0, 32], sizes = [8, 16], strides = [1, 1]} : vector<8x96xf32> to vector<8x16xf32>
    %214 = vector.extract_strided_slice %194 {offsets = [0, 32], sizes = [8, 16], strides = [1, 1]} : vector<8x96xf32> to vector<8x16xf32>
    %215 = arith.mulf %204, %214 : vector<8x16xf32>
    %216 = arith.addf %213, %215 : vector<8x16xf32>
    %217 = math.tanh %216 : vector<8x16xf32>
    %cst_38 = arith.constant 1.000000e+00 : f32
    %218 = vector.broadcast %cst_38 : f32 to vector<8x16xf32>
    %219 = arith.subf %218, %212 : vector<8x16xf32>
    %220 = arith.mulf %219, %217 : vector<8x16xf32>
    %221 = arith.mulf %212, %164 : vector<8x16xf32>
    %222 = arith.addf %220, %221 : vector<8x16xf32>
    %223 = vector.extract_strided_slice %196 {offsets = [0, 48], sizes = [8, 16], strides = [1, 1]} : vector<8x96xf32> to vector<8x16xf32>
    %224 = vector.extract_strided_slice %194 {offsets = [0, 48], sizes = [8, 16], strides = [1, 1]} : vector<8x96xf32> to vector<8x16xf32>
    %225 = arith.addf %223, %224 : vector<8x16xf32>
    %226 = arith.negf %225 : vector<8x16xf32>
    %227 = math.exp %226 : vector<8x16xf32>
    %cst_39 = arith.constant 1.000000e+00 : f32
    %228 = vector.broadcast %cst_39 : f32 to vector<8x16xf32>
    %229 = arith.addf %228, %227 : vector<8x16xf32>
    %230 = arith.divf %228, %229 : vector<8x16xf32>
    %231 = vector.extract_strided_slice %196 {offsets = [0, 64], sizes = [8, 16], strides = [1, 1]} : vector<8x96xf32> to vector<8x16xf32>
    %232 = vector.extract_strided_slice %194 {offsets = [0, 64], sizes = [8, 16], strides = [1, 1]} : vector<8x96xf32> to vector<8x16xf32>
    %233 = arith.addf %231, %232 : vector<8x16xf32>
    %234 = arith.negf %233 : vector<8x16xf32>
    %235 = math.exp %234 : vector<8x16xf32>
    %cst_40 = arith.constant 1.000000e+00 : f32
    %236 = vector.broadcast %cst_40 : f32 to vector<8x16xf32>
    %237 = arith.addf %236, %235 : vector<8x16xf32>
    %238 = arith.divf %236, %237 : vector<8x16xf32>
    %239 = vector.extract_strided_slice %196 {offsets = [0, 80], sizes = [8, 16], strides = [1, 1]} : vector<8x96xf32> to vector<8x16xf32>
    %240 = vector.extract_strided_slice %194 {offsets = [0, 80], sizes = [8, 16], strides = [1, 1]} : vector<8x96xf32> to vector<8x16xf32>
    %241 = arith.mulf %230, %240 : vector<8x16xf32>
    %242 = arith.addf %239, %241 : vector<8x16xf32>
    %243 = math.tanh %242 : vector<8x16xf32>
    %cst_41 = arith.constant 1.000000e+00 : f32
    %244 = vector.broadcast %cst_41 : f32 to vector<8x16xf32>
    %245 = arith.subf %244, %238 : vector<8x16xf32>
    %246 = arith.mulf %245, %243 : vector<8x16xf32>
    %247 = arith.mulf %238, %190 : vector<8x16xf32>
    %248 = arith.addf %246, %247 : vector<8x16xf32>
    %249 = tpu.concatenate %222, %248 in 1 : vector<8x16xf32>, vector<8x16xf32> -> vector<8x32xf32>
    %cst_42 = arith.constant dense<0.000000e+00> : vector<8x96xf32>
    %250 = tpu.matmul %249, %13, %cst_42 {dimension_numbers = #tpu.dot_dimension_numbers<[1], [0], [0], [1], [0, 0, 1, 1], [], []>} : vector<8x32xf32>, vector<32x96xf32>, vector<8x96xf32> -> vector<8x96xf32>
    %251 = vector.broadcast %14 : vector<1x96xf32> to vector<8x96xf32>
    %252 = arith.addf %250, %251 : vector<8x96xf32>
    %253 = vector.extract_strided_slice %12 {offsets = [32, 0], sizes = [8, 96], strides = [1, 1]} : vector<64x96xf32> to vector<8x96xf32>
    %254 = vector.extract_strided_slice %12 {offsets = [24, 0], sizes = [8, 96], strides = [1, 1]} : vector<64x96xf32> to vector<8x96xf32>
    %255 = vector.extract_strided_slice %253 {offsets = [0, 0], sizes = [8, 16], strides = [1, 1]} : vector<8x96xf32> to vector<8x16xf32>
    %256 = vector.extract_strided_slice %252 {offsets = [0, 0], sizes = [8, 16], strides = [1, 1]} : vector<8x96xf32> to vector<8x16xf32>
    %257 = arith.addf %255, %256 : vector<8x16xf32>
    %258 = arith.negf %257 : vector<8x16xf32>
    %259 = math.exp %258 : vector<8x16xf32>
    %cst_43 = arith.constant 1.000000e+00 : f32
    %260 = vector.broadcast %cst_43 : f32 to vector<8x16xf32>
    %261 = arith.addf %260, %259 : vector<8x16xf32>
    %262 = arith.divf %260, %261 : vector<8x16xf32>
    %263 = vector.extract_strided_slice %253 {offsets = [0, 16], sizes = [8, 16], strides = [1, 1]} : vector<8x96xf32> to vector<8x16xf32>
    %264 = vector.extract_strided_slice %252 {offsets = [0, 16], sizes = [8, 16], strides = [1, 1]} : vector<8x96xf32> to vector<8x16xf32>
    %265 = arith.addf %263, %264 : vector<8x16xf32>
    %266 = arith.negf %265 : vector<8x16xf32>
    %267 = math.exp %266 : vector<8x16xf32>
    %cst_44 = arith.constant 1.000000e+00 : f32
    %268 = vector.broadcast %cst_44 : f32 to vector<8x16xf32>
    %269 = arith.addf %268, %267 : vector<8x16xf32>
    %270 = arith.divf %268, %269 : vector<8x16xf32>
    %271 = vector.extract_strided_slice %253 {offsets = [0, 32], sizes = [8, 16], strides = [1, 1]} : vector<8x96xf32> to vector<8x16xf32>
    %272 = vector.extract_strided_slice %252 {offsets = [0, 32], sizes = [8, 16], strides = [1, 1]} : vector<8x96xf32> to vector<8x16xf32>
    %273 = arith.mulf %262, %272 : vector<8x16xf32>
    %274 = arith.addf %271, %273 : vector<8x16xf32>
    %275 = math.tanh %274 : vector<8x16xf32>
    %cst_45 = arith.constant 1.000000e+00 : f32
    %276 = vector.broadcast %cst_45 : f32 to vector<8x16xf32>
    %277 = arith.subf %276, %270 : vector<8x16xf32>
    %278 = arith.mulf %277, %275 : vector<8x16xf32>
    %279 = arith.mulf %270, %222 : vector<8x16xf32>
    %280 = arith.addf %278, %279 : vector<8x16xf32>
    %281 = vector.extract_strided_slice %254 {offsets = [0, 48], sizes = [8, 16], strides = [1, 1]} : vector<8x96xf32> to vector<8x16xf32>
    %282 = vector.extract_strided_slice %252 {offsets = [0, 48], sizes = [8, 16], strides = [1, 1]} : vector<8x96xf32> to vector<8x16xf32>
    %283 = arith.addf %281, %282 : vector<8x16xf32>
    %284 = arith.negf %283 : vector<8x16xf32>
    %285 = math.exp %284 : vector<8x16xf32>
    %cst_46 = arith.constant 1.000000e+00 : f32
    %286 = vector.broadcast %cst_46 : f32 to vector<8x16xf32>
    %287 = arith.addf %286, %285 : vector<8x16xf32>
    %288 = arith.divf %286, %287 : vector<8x16xf32>
    %289 = vector.extract_strided_slice %254 {offsets = [0, 64], sizes = [8, 16], strides = [1, 1]} : vector<8x96xf32> to vector<8x16xf32>
    %290 = vector.extract_strided_slice %252 {offsets = [0, 64], sizes = [8, 16], strides = [1, 1]} : vector<8x96xf32> to vector<8x16xf32>
    %291 = arith.addf %289, %290 : vector<8x16xf32>
    %292 = arith.negf %291 : vector<8x16xf32>
    %293 = math.exp %292 : vector<8x16xf32>
    %cst_47 = arith.constant 1.000000e+00 : f32
    %294 = vector.broadcast %cst_47 : f32 to vector<8x16xf32>
    %295 = arith.addf %294, %293 : vector<8x16xf32>
    %296 = arith.divf %294, %295 : vector<8x16xf32>
    %297 = vector.extract_strided_slice %254 {offsets = [0, 80], sizes = [8, 16], strides = [1, 1]} : vector<8x96xf32> to vector<8x16xf32>
    %298 = vector.extract_strided_slice %252 {offsets = [0, 80], sizes = [8, 16], strides = [1, 1]} : vector<8x96xf32> to vector<8x16xf32>
    %299 = arith.mulf %288, %298 : vector<8x16xf32>
    %300 = arith.addf %297, %299 : vector<8x16xf32>
    %301 = math.tanh %300 : vector<8x16xf32>
    %cst_48 = arith.constant 1.000000e+00 : f32
    %302 = vector.broadcast %cst_48 : f32 to vector<8x16xf32>
    %303 = arith.subf %302, %296 : vector<8x16xf32>
    %304 = arith.mulf %303, %301 : vector<8x16xf32>
    %305 = arith.mulf %296, %248 : vector<8x16xf32>
    %306 = arith.addf %304, %305 : vector<8x16xf32>
    %307 = tpu.concatenate %280, %306 in 1 : vector<8x16xf32>, vector<8x16xf32> -> vector<8x32xf32>
    %cst_49 = arith.constant dense<0.000000e+00> : vector<8x96xf32>
    %308 = tpu.matmul %307, %13, %cst_49 {dimension_numbers = #tpu.dot_dimension_numbers<[1], [0], [0], [1], [0, 0, 1, 1], [], []>} : vector<8x32xf32>, vector<32x96xf32>, vector<8x96xf32> -> vector<8x96xf32>
    %309 = vector.broadcast %14 : vector<1x96xf32> to vector<8x96xf32>
    %310 = arith.addf %308, %309 : vector<8x96xf32>
    %311 = vector.extract_strided_slice %12 {offsets = [40, 0], sizes = [8, 96], strides = [1, 1]} : vector<64x96xf32> to vector<8x96xf32>
    %312 = vector.extract_strided_slice %12 {offsets = [16, 0], sizes = [8, 96], strides = [1, 1]} : vector<64x96xf32> to vector<8x96xf32>
    %313 = vector.extract_strided_slice %311 {offsets = [0, 0], sizes = [8, 16], strides = [1, 1]} : vector<8x96xf32> to vector<8x16xf32>
    %314 = vector.extract_strided_slice %310 {offsets = [0, 0], sizes = [8, 16], strides = [1, 1]} : vector<8x96xf32> to vector<8x16xf32>
    %315 = arith.addf %313, %314 : vector<8x16xf32>
    %316 = arith.negf %315 : vector<8x16xf32>
    %317 = math.exp %316 : vector<8x16xf32>
    %cst_50 = arith.constant 1.000000e+00 : f32
    %318 = vector.broadcast %cst_50 : f32 to vector<8x16xf32>
    %319 = arith.addf %318, %317 : vector<8x16xf32>
    %320 = arith.divf %318, %319 : vector<8x16xf32>
    %321 = vector.extract_strided_slice %311 {offsets = [0, 16], sizes = [8, 16], strides = [1, 1]} : vector<8x96xf32> to vector<8x16xf32>
    %322 = vector.extract_strided_slice %310 {offsets = [0, 16], sizes = [8, 16], strides = [1, 1]} : vector<8x96xf32> to vector<8x16xf32>
    %323 = arith.addf %321, %322 : vector<8x16xf32>
    %324 = arith.negf %323 : vector<8x16xf32>
    %325 = math.exp %324 : vector<8x16xf32>
    %cst_51 = arith.constant 1.000000e+00 : f32
    %326 = vector.broadcast %cst_51 : f32 to vector<8x16xf32>
    %327 = arith.addf %326, %325 : vector<8x16xf32>
    %328 = arith.divf %326, %327 : vector<8x16xf32>
    %329 = vector.extract_strided_slice %311 {offsets = [0, 32], sizes = [8, 16], strides = [1, 1]} : vector<8x96xf32> to vector<8x16xf32>
    %330 = vector.extract_strided_slice %310 {offsets = [0, 32], sizes = [8, 16], strides = [1, 1]} : vector<8x96xf32> to vector<8x16xf32>
    %331 = arith.mulf %320, %330 : vector<8x16xf32>
    %332 = arith.addf %329, %331 : vector<8x16xf32>
    %333 = math.tanh %332 : vector<8x16xf32>
    %cst_52 = arith.constant 1.000000e+00 : f32
    %334 = vector.broadcast %cst_52 : f32 to vector<8x16xf32>
    %335 = arith.subf %334, %328 : vector<8x16xf32>
    %336 = arith.mulf %335, %333 : vector<8x16xf32>
    %337 = arith.mulf %328, %280 : vector<8x16xf32>
    %338 = arith.addf %336, %337 : vector<8x16xf32>
    %339 = vector.extract_strided_slice %312 {offsets = [0, 48], sizes = [8, 16], strides = [1, 1]} : vector<8x96xf32> to vector<8x16xf32>
    %340 = vector.extract_strided_slice %310 {offsets = [0, 48], sizes = [8, 16], strides = [1, 1]} : vector<8x96xf32> to vector<8x16xf32>
    %341 = arith.addf %339, %340 : vector<8x16xf32>
    %342 = arith.negf %341 : vector<8x16xf32>
    %343 = math.exp %342 : vector<8x16xf32>
    %cst_53 = arith.constant 1.000000e+00 : f32
    %344 = vector.broadcast %cst_53 : f32 to vector<8x16xf32>
    %345 = arith.addf %344, %343 : vector<8x16xf32>
    %346 = arith.divf %344, %345 : vector<8x16xf32>
    %347 = vector.extract_strided_slice %312 {offsets = [0, 64], sizes = [8, 16], strides = [1, 1]} : vector<8x96xf32> to vector<8x16xf32>
    %348 = vector.extract_strided_slice %310 {offsets = [0, 64], sizes = [8, 16], strides = [1, 1]} : vector<8x96xf32> to vector<8x16xf32>
    %349 = arith.addf %347, %348 : vector<8x16xf32>
    %350 = arith.negf %349 : vector<8x16xf32>
    %351 = math.exp %350 : vector<8x16xf32>
    %cst_54 = arith.constant 1.000000e+00 : f32
    %352 = vector.broadcast %cst_54 : f32 to vector<8x16xf32>
    %353 = arith.addf %352, %351 : vector<8x16xf32>
    %354 = arith.divf %352, %353 : vector<8x16xf32>
    %355 = vector.extract_strided_slice %312 {offsets = [0, 80], sizes = [8, 16], strides = [1, 1]} : vector<8x96xf32> to vector<8x16xf32>
    %356 = vector.extract_strided_slice %310 {offsets = [0, 80], sizes = [8, 16], strides = [1, 1]} : vector<8x96xf32> to vector<8x16xf32>
    %357 = arith.mulf %346, %356 : vector<8x16xf32>
    %358 = arith.addf %355, %357 : vector<8x16xf32>
    %359 = math.tanh %358 : vector<8x16xf32>
    %cst_55 = arith.constant 1.000000e+00 : f32
    %360 = vector.broadcast %cst_55 : f32 to vector<8x16xf32>
    %361 = arith.subf %360, %354 : vector<8x16xf32>
    %362 = arith.mulf %361, %359 : vector<8x16xf32>
    %363 = arith.mulf %354, %306 : vector<8x16xf32>
    %364 = arith.addf %362, %363 : vector<8x16xf32>
    %365 = tpu.concatenate %338, %364 in 1 : vector<8x16xf32>, vector<8x16xf32> -> vector<8x32xf32>
    %cst_56 = arith.constant dense<0.000000e+00> : vector<8x96xf32>
    %366 = tpu.matmul %365, %13, %cst_56 {dimension_numbers = #tpu.dot_dimension_numbers<[1], [0], [0], [1], [0, 0, 1, 1], [], []>} : vector<8x32xf32>, vector<32x96xf32>, vector<8x96xf32> -> vector<8x96xf32>
    %367 = vector.broadcast %14 : vector<1x96xf32> to vector<8x96xf32>
    %368 = arith.addf %366, %367 : vector<8x96xf32>
    %369 = vector.extract_strided_slice %12 {offsets = [48, 0], sizes = [8, 96], strides = [1, 1]} : vector<64x96xf32> to vector<8x96xf32>
    %370 = vector.extract_strided_slice %12 {offsets = [8, 0], sizes = [8, 96], strides = [1, 1]} : vector<64x96xf32> to vector<8x96xf32>
    %371 = vector.extract_strided_slice %369 {offsets = [0, 0], sizes = [8, 16], strides = [1, 1]} : vector<8x96xf32> to vector<8x16xf32>
    %372 = vector.extract_strided_slice %368 {offsets = [0, 0], sizes = [8, 16], strides = [1, 1]} : vector<8x96xf32> to vector<8x16xf32>
    %373 = arith.addf %371, %372 : vector<8x16xf32>
    %374 = arith.negf %373 : vector<8x16xf32>
    %375 = math.exp %374 : vector<8x16xf32>
    %cst_57 = arith.constant 1.000000e+00 : f32
    %376 = vector.broadcast %cst_57 : f32 to vector<8x16xf32>
    %377 = arith.addf %376, %375 : vector<8x16xf32>
    %378 = arith.divf %376, %377 : vector<8x16xf32>
    %379 = vector.extract_strided_slice %369 {offsets = [0, 16], sizes = [8, 16], strides = [1, 1]} : vector<8x96xf32> to vector<8x16xf32>
    %380 = vector.extract_strided_slice %368 {offsets = [0, 16], sizes = [8, 16], strides = [1, 1]} : vector<8x96xf32> to vector<8x16xf32>
    %381 = arith.addf %379, %380 : vector<8x16xf32>
    %382 = arith.negf %381 : vector<8x16xf32>
    %383 = math.exp %382 : vector<8x16xf32>
    %cst_58 = arith.constant 1.000000e+00 : f32
    %384 = vector.broadcast %cst_58 : f32 to vector<8x16xf32>
    %385 = arith.addf %384, %383 : vector<8x16xf32>
    %386 = arith.divf %384, %385 : vector<8x16xf32>
    %387 = vector.extract_strided_slice %369 {offsets = [0, 32], sizes = [8, 16], strides = [1, 1]} : vector<8x96xf32> to vector<8x16xf32>
    %388 = vector.extract_strided_slice %368 {offsets = [0, 32], sizes = [8, 16], strides = [1, 1]} : vector<8x96xf32> to vector<8x16xf32>
    %389 = arith.mulf %378, %388 : vector<8x16xf32>
    %390 = arith.addf %387, %389 : vector<8x16xf32>
    %391 = math.tanh %390 : vector<8x16xf32>
    %cst_59 = arith.constant 1.000000e+00 : f32
    %392 = vector.broadcast %cst_59 : f32 to vector<8x16xf32>
    %393 = arith.subf %392, %386 : vector<8x16xf32>
    %394 = arith.mulf %393, %391 : vector<8x16xf32>
    %395 = arith.mulf %386, %338 : vector<8x16xf32>
    %396 = arith.addf %394, %395 : vector<8x16xf32>
    %397 = vector.extract_strided_slice %370 {offsets = [0, 48], sizes = [8, 16], strides = [1, 1]} : vector<8x96xf32> to vector<8x16xf32>
    %398 = vector.extract_strided_slice %368 {offsets = [0, 48], sizes = [8, 16], strides = [1, 1]} : vector<8x96xf32> to vector<8x16xf32>
    %399 = arith.addf %397, %398 : vector<8x16xf32>
    %400 = arith.negf %399 : vector<8x16xf32>
    %401 = math.exp %400 : vector<8x16xf32>
    %cst_60 = arith.constant 1.000000e+00 : f32
    %402 = vector.broadcast %cst_60 : f32 to vector<8x16xf32>
    %403 = arith.addf %402, %401 : vector<8x16xf32>
    %404 = arith.divf %402, %403 : vector<8x16xf32>
    %405 = vector.extract_strided_slice %370 {offsets = [0, 64], sizes = [8, 16], strides = [1, 1]} : vector<8x96xf32> to vector<8x16xf32>
    %406 = vector.extract_strided_slice %368 {offsets = [0, 64], sizes = [8, 16], strides = [1, 1]} : vector<8x96xf32> to vector<8x16xf32>
    %407 = arith.addf %405, %406 : vector<8x16xf32>
    %408 = arith.negf %407 : vector<8x16xf32>
    %409 = math.exp %408 : vector<8x16xf32>
    %cst_61 = arith.constant 1.000000e+00 : f32
    %410 = vector.broadcast %cst_61 : f32 to vector<8x16xf32>
    %411 = arith.addf %410, %409 : vector<8x16xf32>
    %412 = arith.divf %410, %411 : vector<8x16xf32>
    %413 = vector.extract_strided_slice %370 {offsets = [0, 80], sizes = [8, 16], strides = [1, 1]} : vector<8x96xf32> to vector<8x16xf32>
    %414 = vector.extract_strided_slice %368 {offsets = [0, 80], sizes = [8, 16], strides = [1, 1]} : vector<8x96xf32> to vector<8x16xf32>
    %415 = arith.mulf %404, %414 : vector<8x16xf32>
    %416 = arith.addf %413, %415 : vector<8x16xf32>
    %417 = math.tanh %416 : vector<8x16xf32>
    %cst_62 = arith.constant 1.000000e+00 : f32
    %418 = vector.broadcast %cst_62 : f32 to vector<8x16xf32>
    %419 = arith.subf %418, %412 : vector<8x16xf32>
    %420 = arith.mulf %419, %417 : vector<8x16xf32>
    %421 = arith.mulf %412, %364 : vector<8x16xf32>
    %422 = arith.addf %420, %421 : vector<8x16xf32>
    %423 = tpu.concatenate %396, %422 in 1 : vector<8x16xf32>, vector<8x16xf32> -> vector<8x32xf32>
    %cst_63 = arith.constant dense<0.000000e+00> : vector<8x96xf32>
    %424 = tpu.matmul %423, %13, %cst_63 {dimension_numbers = #tpu.dot_dimension_numbers<[1], [0], [0], [1], [0, 0, 1, 1], [], []>} : vector<8x32xf32>, vector<32x96xf32>, vector<8x96xf32> -> vector<8x96xf32>
    %425 = vector.broadcast %14 : vector<1x96xf32> to vector<8x96xf32>
    %426 = arith.addf %424, %425 : vector<8x96xf32>
    %427 = vector.extract_strided_slice %12 {offsets = [56, 0], sizes = [8, 96], strides = [1, 1]} : vector<64x96xf32> to vector<8x96xf32>
    %428 = vector.extract_strided_slice %12 {offsets = [0, 0], sizes = [8, 96], strides = [1, 1]} : vector<64x96xf32> to vector<8x96xf32>
    %429 = vector.extract_strided_slice %427 {offsets = [0, 0], sizes = [8, 16], strides = [1, 1]} : vector<8x96xf32> to vector<8x16xf32>
    %430 = vector.extract_strided_slice %426 {offsets = [0, 0], sizes = [8, 16], strides = [1, 1]} : vector<8x96xf32> to vector<8x16xf32>
    %431 = arith.addf %429, %430 : vector<8x16xf32>
    %432 = arith.negf %431 : vector<8x16xf32>
    %433 = math.exp %432 : vector<8x16xf32>
    %cst_64 = arith.constant 1.000000e+00 : f32
    %434 = vector.broadcast %cst_64 : f32 to vector<8x16xf32>
    %435 = arith.addf %434, %433 : vector<8x16xf32>
    %436 = arith.divf %434, %435 : vector<8x16xf32>
    %437 = vector.extract_strided_slice %427 {offsets = [0, 16], sizes = [8, 16], strides = [1, 1]} : vector<8x96xf32> to vector<8x16xf32>
    %438 = vector.extract_strided_slice %426 {offsets = [0, 16], sizes = [8, 16], strides = [1, 1]} : vector<8x96xf32> to vector<8x16xf32>
    %439 = arith.addf %437, %438 : vector<8x16xf32>
    %440 = arith.negf %439 : vector<8x16xf32>
    %441 = math.exp %440 : vector<8x16xf32>
    %cst_65 = arith.constant 1.000000e+00 : f32
    %442 = vector.broadcast %cst_65 : f32 to vector<8x16xf32>
    %443 = arith.addf %442, %441 : vector<8x16xf32>
    %444 = arith.divf %442, %443 : vector<8x16xf32>
    %445 = vector.extract_strided_slice %427 {offsets = [0, 32], sizes = [8, 16], strides = [1, 1]} : vector<8x96xf32> to vector<8x16xf32>
    %446 = vector.extract_strided_slice %426 {offsets = [0, 32], sizes = [8, 16], strides = [1, 1]} : vector<8x96xf32> to vector<8x16xf32>
    %447 = arith.mulf %436, %446 : vector<8x16xf32>
    %448 = arith.addf %445, %447 : vector<8x16xf32>
    %449 = math.tanh %448 : vector<8x16xf32>
    %cst_66 = arith.constant 1.000000e+00 : f32
    %450 = vector.broadcast %cst_66 : f32 to vector<8x16xf32>
    %451 = arith.subf %450, %444 : vector<8x16xf32>
    %452 = arith.mulf %451, %449 : vector<8x16xf32>
    %453 = arith.mulf %444, %396 : vector<8x16xf32>
    %454 = arith.addf %452, %453 : vector<8x16xf32>
    %455 = vector.extract_strided_slice %428 {offsets = [0, 48], sizes = [8, 16], strides = [1, 1]} : vector<8x96xf32> to vector<8x16xf32>
    %456 = vector.extract_strided_slice %426 {offsets = [0, 48], sizes = [8, 16], strides = [1, 1]} : vector<8x96xf32> to vector<8x16xf32>
    %457 = arith.addf %455, %456 : vector<8x16xf32>
    %458 = arith.negf %457 : vector<8x16xf32>
    %459 = math.exp %458 : vector<8x16xf32>
    %cst_67 = arith.constant 1.000000e+00 : f32
    %460 = vector.broadcast %cst_67 : f32 to vector<8x16xf32>
    %461 = arith.addf %460, %459 : vector<8x16xf32>
    %462 = arith.divf %460, %461 : vector<8x16xf32>
    %463 = vector.extract_strided_slice %428 {offsets = [0, 64], sizes = [8, 16], strides = [1, 1]} : vector<8x96xf32> to vector<8x16xf32>
    %464 = vector.extract_strided_slice %426 {offsets = [0, 64], sizes = [8, 16], strides = [1, 1]} : vector<8x96xf32> to vector<8x16xf32>
    %465 = arith.addf %463, %464 : vector<8x16xf32>
    %466 = arith.negf %465 : vector<8x16xf32>
    %467 = math.exp %466 : vector<8x16xf32>
    %cst_68 = arith.constant 1.000000e+00 : f32
    %468 = vector.broadcast %cst_68 : f32 to vector<8x16xf32>
    %469 = arith.addf %468, %467 : vector<8x16xf32>
    %470 = arith.divf %468, %469 : vector<8x16xf32>
    %471 = vector.extract_strided_slice %428 {offsets = [0, 80], sizes = [8, 16], strides = [1, 1]} : vector<8x96xf32> to vector<8x16xf32>
    %472 = vector.extract_strided_slice %426 {offsets = [0, 80], sizes = [8, 16], strides = [1, 1]} : vector<8x96xf32> to vector<8x16xf32>
    %473 = arith.mulf %462, %472 : vector<8x16xf32>
    %474 = arith.addf %471, %473 : vector<8x16xf32>
    %475 = math.tanh %474 : vector<8x16xf32>
    %cst_69 = arith.constant 1.000000e+00 : f32
    %476 = vector.broadcast %cst_69 : f32 to vector<8x16xf32>
    %477 = arith.subf %476, %470 : vector<8x16xf32>
    %478 = arith.mulf %477, %475 : vector<8x16xf32>
    %479 = arith.mulf %470, %422 : vector<8x16xf32>
    %480 = arith.addf %478, %479 : vector<8x16xf32>
    %481 = tpu.concatenate %48, %480 in 1 : vector<8x16xf32>, vector<8x16xf32> -> vector<8x32xf32>
    %482 = tpu.concatenate %106, %422 in 1 : vector<8x16xf32>, vector<8x16xf32> -> vector<8x32xf32>
    %483 = tpu.concatenate %164, %364 in 1 : vector<8x16xf32>, vector<8x16xf32> -> vector<8x32xf32>
    %484 = tpu.concatenate %222, %306 in 1 : vector<8x16xf32>, vector<8x16xf32> -> vector<8x32xf32>
    %485 = tpu.concatenate %280, %248 in 1 : vector<8x16xf32>, vector<8x16xf32> -> vector<8x32xf32>
    %486 = tpu.concatenate %338, %190 in 1 : vector<8x16xf32>, vector<8x16xf32> -> vector<8x32xf32>
    %487 = tpu.concatenate %396, %132 in 1 : vector<8x16xf32>, vector<8x16xf32> -> vector<8x32xf32>
    %488 = tpu.concatenate %454, %74 in 1 : vector<8x16xf32>, vector<8x16xf32> -> vector<8x32xf32>
    %489 = tpu.concatenate %481, %482, %483, %484, %485, %486, %487, %488 in 0 : vector<8x32xf32>, vector<8x32xf32>, vector<8x32xf32>, vector<8x32xf32>, vector<8x32xf32>, vector<8x32xf32>, vector<8x32xf32>, vector<8x32xf32> -> vector<64x32xf32>
    %cst_70 = arith.constant dense<0.000000e+00> : vector<64xf32>
    %490 = vector.multi_reduction <add>, %489, %cst_70 [1] : vector<64x32xf32> to vector<64xf32>
    %491 = vector.shape_cast %490 : vector<64xf32> to vector<64x1xf32>
    %cst_71 = arith.constant 3.200000e+01 : f32
    %492 = vector.broadcast %cst_71 : f32 to vector<64x1xf32>
    %493 = arith.divf %491, %492 : vector<64x1xf32>
    %494 = vector.broadcast %493 : vector<64x1xf32> to vector<64x32xf32>
    %495 = arith.subf %489, %494 : vector<64x32xf32>
    %496 = arith.mulf %495, %495 : vector<64x32xf32>
    %cst_72 = arith.constant dense<0.000000e+00> : vector<64xf32>
    %497 = vector.multi_reduction <add>, %496, %cst_72 [1] : vector<64x32xf32> to vector<64xf32>
    %498 = vector.shape_cast %497 : vector<64xf32> to vector<64x1xf32>
    %cst_73 = arith.constant 3.200000e+01 : f32
    %499 = vector.broadcast %cst_73 : f32 to vector<64x1xf32>
    %500 = arith.divf %498, %499 : vector<64x1xf32>
    %501 = vector.broadcast %493 : vector<64x1xf32> to vector<64x32xf32>
    %502 = arith.subf %489, %501 : vector<64x32xf32>
    %cst_74 = arith.constant 9.99999974E-6 : f32
    %503 = vector.broadcast %cst_74 : f32 to vector<64x1xf32>
    %504 = arith.addf %500, %503 : vector<64x1xf32>
    %505 = math.rsqrt %504 : vector<64x1xf32>
    %506 = vector.broadcast %505 : vector<64x1xf32> to vector<64x32xf32>
    %507 = arith.mulf %502, %506 : vector<64x32xf32>
    %c0_75 = arith.constant 0 : index
    %c0_76 = arith.constant 0 : index
    %508 = vector.load %arg6[%c0_75, %c0_76] : memref<1x32xf32, #tpu.memory_space<vmem>>, vector<1x32xf32>
    %509 = vector.broadcast %508 : vector<1x32xf32> to vector<64x32xf32>
    %510 = arith.mulf %507, %509 : vector<64x32xf32>
    %c0_77 = arith.constant 0 : index
    %c0_78 = arith.constant 0 : index
    %511 = vector.load %arg7[%c0_77, %c0_78] : memref<1x32xf32, #tpu.memory_space<vmem>>, vector<1x32xf32>
    %512 = vector.broadcast %511 : vector<1x32xf32> to vector<64x32xf32>
    %513 = arith.addf %510, %512 : vector<64x32xf32>
    %c0_79 = arith.constant 0 : index
    %c0_80 = arith.constant 0 : index
    %514 = vector.load %arg8[%c0_79, %c0_80] : memref<32x16xf32, #tpu.memory_space<vmem>>, vector<32x16xf32>
    %cst_81 = arith.constant dense<0.000000e+00> : vector<64x16xf32>
    %515 = tpu.matmul %513, %514, %cst_81 {dimension_numbers = #tpu.dot_dimension_numbers<[1], [0], [0], [1], [0, 0, 1, 1], [], []>} : vector<64x32xf32>, vector<32x16xf32>, vector<64x16xf32> -> vector<64x16xf32>
    %c0_82 = arith.constant 0 : index
    %c0_83 = arith.constant 0 : index
    %516 = vector.load %arg9[%c0_82, %c0_83] : memref<1x16xf32, #tpu.memory_space<vmem>>, vector<1x16xf32>
    %517 = vector.broadcast %516 : vector<1x16xf32> to vector<64x16xf32>
    %518 = arith.addf %515, %517 : vector<64x16xf32>
    %519 = math.tanh %518 : vector<64x16xf32>
    %520 = vector.shape_cast %513 : vector<64x32xf32> to vector<8x8x32xf32>
    %521 = vector.shape_cast %519 : vector<64x16xf32> to vector<8x8x16xf32>
    %c0_84 = arith.constant 0 : index
    %c0_85 = arith.constant 0 : index
    %522 = vector.load %arg10[%c0_84, %c0_85] : memref<1x16xf32, #tpu.memory_space<vmem>>, vector<1x16xf32>
    %523 = vector.shape_cast %522 : vector<1x16xf32> to vector<1x1x16xf32>
    %524 = vector.broadcast %523 : vector<1x1x16xf32> to vector<8x8x16xf32>
    %525 = arith.mulf %521, %524 : vector<8x8x16xf32>
    %cst_86 = arith.constant dense<0.000000e+00> : vector<8x8xf32>
    %526 = vector.multi_reduction <add>, %525, %cst_86 [2] : vector<8x8x16xf32> to vector<8x8xf32>
    %c0_87 = arith.constant 0 : index
    %c0_88 = arith.constant 0 : index
    %527 = memref.load %arg11[%c0_87, %c0_88] : memref<1x1xf32, #tpu.memory_space<smem>>
    %528 = vector.broadcast %527 : f32 to vector<8x8xf32>
    %529 = arith.addf %526, %528 : vector<8x8xf32>
    %cst_89 = arith.constant dense<0xFF800000> : vector<8xf32>
    %530 = vector.multi_reduction <maximumf>, %529, %cst_89 [1] : vector<8x8xf32> to vector<8xf32>
    %531 = vector.shape_cast %530 : vector<8xf32> to vector<8x1xf32>
    %532 = vector.broadcast %531 : vector<8x1xf32> to vector<8x8xf32>
    %533 = arith.subf %529, %532 : vector<8x8xf32>
    %534 = math.exp %533 : vector<8x8xf32>
    %cst_90 = arith.constant dense<0.000000e+00> : vector<8xf32>
    %535 = vector.multi_reduction <add>, %534, %cst_90 [1] : vector<8x8xf32> to vector<8xf32>
    %536 = vector.shape_cast %535 : vector<8xf32> to vector<8x1xf32>
    %537 = vector.broadcast %536 : vector<8x1xf32> to vector<8x8xf32>
    %538 = arith.divf %534, %537 : vector<8x8xf32>
    %c0_91 = arith.constant 0 : index
    %c0_92 = arith.constant 0 : index
    %539 = vector.load %arg13[%c0_91, %c0_92] : memref<8x8xf32, #tpu.memory_space<vmem>>, vector<8x8xf32>
    tpu.vector_store %arg13[%c0_91, %c0_92], %538 {strides = array<i32>} : memref<8x8xf32, #tpu.memory_space<vmem>>, vector<8x8xf32>,
    %540 = vector.shape_cast %538 : vector<8x8xf32> to vector<8x8x1xf32>
    %541 = vector.broadcast %540 : vector<8x8x1xf32> to vector<8x8x32xf32>
    %542 = arith.mulf %520, %541 : vector<8x8x32xf32>
    %cst_93 = arith.constant dense<0.000000e+00> : vector<8x32xf32>
    %543 = vector.multi_reduction <add>, %542, %cst_93 [1] : vector<8x8x32xf32> to vector<8x32xf32>
    %c0_94 = arith.constant 0 : index
    %c0_95 = arith.constant 0 : index
    %544 = vector.load %arg12[%c0_94, %c0_95] : memref<8x32xf32, #tpu.memory_space<vmem>>, vector<8x32xf32>
    tpu.vector_store %arg12[%c0_94, %c0_95], %543 {strides = array<i32>} : memref<8x32xf32, #tpu.memory_space<vmem>>, vector<8x32xf32>,
    return
  }
}

</mosaic_0001>

<llo_original>
// kernel: word_attn_net.1
$region0: #{word_attn_net.1}
  #allocation0 [shape = 'u32[]', space=smem, size = 0x4, offset = 0x4, fixed_abs, tag = 'smem constant byte address 0x4 - core index']
  #allocation1 [shape = 'u32[144,128]{1,0:T(1,128)}', space=vmem, size = 0x12000, scoped, tag = 'internal scratch']
  #allocation2 [shape = 'f32[1,1]{1,0:T(1,128)S(6)}', space=smem, size = 0x200, scoped, tag = 'scoped memory for word_attn_net.1']
  %s0 = inlined_call_operand.vmem [shape: s32[64,1], index: 0, kind: input, shape index: {}]
  %s1 = inlined_call_operand.vmem [shape: f32[50,16], index: 1, kind: input, shape index: {}]
  %s2 = inlined_call_operand.vmem [shape: f32[16,96], index: 2, kind: input, shape index: {}]
  %s3 = inlined_call_operand.vmem [shape: f32[1,96], index: 3, kind: input, shape index: {}]
  %s4 = inlined_call_operand.vmem [shape: f32[32,96], index: 4, kind: input, shape index: {}]
  %s5 = inlined_call_operand.vmem [shape: f32[1,96], index: 5, kind: input, shape index: {}]
  %s6 = inlined_call_operand.vmem [shape: f32[1,32], index: 6, kind: input, shape index: {}]
  %s7 = inlined_call_operand.vmem [shape: f32[1,32], index: 7, kind: input, shape index: {}]
  %s8 = inlined_call_operand.vmem [shape: f32[32,16], index: 8, kind: input, shape index: {}]
  %s9 = inlined_call_operand.vmem [shape: f32[1,16], index: 9, kind: input, shape index: {}]
  %s10 = inlined_call_operand.vmem [shape: f32[1,16], index: 10, kind: input, shape index: {}]
  %s11 = inlined_call_operand.<no memory space> [shape: f32[1,1], index: 11, kind: input, shape index: {}]
  %s12 = inlined_call_operand.hbm [shape: f32[8,32], index: 12, kind: output, shape index: {0}]
  %s13 = inlined_call_operand.hbm [shape: f32[8,8], index: 13, kind: output, shape index: {1}]
  %14 = xla_tuple %s12, %s13
  %s15 = sld [smem:[#allocation0]]
  $region66: #{word_attn_net.1} parent=0
    _
  %s17 = ssub.s32 1, %s15
  %s18 = scalar_select 0, %s17, %s15
  %19 = sst [smem:[#allocation2]] %s11
  $region1: #{word_attn_net.1} parent=0
    #allocation3 [shape = 'u8[4096]{0}', space=vmem, size = 0x1000, scoped, tag = 'output window, operand 0, single buffered']
    #allocation4 [shape = 's32[1]{0}', space=sflag, size = 0x4, scoped, tag = 'scoped memory for word_attn_net.1']
    #allocation5 [shape = 'u8[4096]{0}', space=vmem, size = 0x1000, scoped, tag = 'output window, operand 1, single buffered']
    #allocation6 [shape = 's32[1]{0}', space=sflag, size = 0x4, scoped, tag = 'scoped memory for word_attn_net.1']
    %20 = vsyncpa [#allocation4], 0
    %21 = vsyncpa [#allocation6], 0
    // Predicated region
    $region2: #{word_attn_net.1} parent=1 // pred_check
      _
    $region3: #{word_attn_net.1} parent=1 // pred_check_branch
      %23 = sbr.rel (0) target = $region5
    $region4: #{word_attn_net.1} parent=1 // pred_region
      _
    $region5: #{word_attn_net.1} parent=1 // pred_fallthru
      _
    // Predicated region
    $region6: #{word_attn_net.1} parent=1 // pred_check
      _
    $region7: #{word_attn_net.1} parent=1 // pred_check_branch
      %25 = sbr.rel (0) target = $region9
    $region8: #{word_attn_net.1} parent=1 // pred_region
      _
    $region9: #{word_attn_net.1} parent=1 // pred_fallthru
      _
    // Predicated region
    $region10: #{word_attn_net.1} parent=1 // pred_check
      _
    $region11: #{word_attn_net.1} parent=1 // pred_check_branch
      %27 = sbr.rel (0) target = $region13
    $region12: #{word_attn_net.1} parent=1 // pred_region
      _
    $region13: #{word_attn_net.1} parent=1 // pred_fallthru
      _
    // Predicated region
    $region14: #{word_attn_net.1} parent=1 // pred_check
      _
    $region15: #{word_attn_net.1} parent=1 // pred_check_branch
      %29 = sbr.rel (0) target = $region17
    $region16: #{word_attn_net.1} parent=1 // pred_region
      _
    $region17: #{word_attn_net.1} parent=1 // pred_fallthru
      _
    // Predicated region
    $region18: #{word_attn_net.1} parent=1 // pred_check
      _
    $region19: #{word_attn_net.1} parent=1 // pred_check_branch
      %31 = sbr.rel (0) target = $region21
    $region20: #{word_attn_net.1} parent=1 // pred_region
      _
    $region21: #{word_attn_net.1} parent=1 // pred_fallthru
      _
    // Predicated region
    $region22: #{word_attn_net.1} parent=1 // pred_check
      _
    $region23: #{word_attn_net.1} parent=1 // pred_check_branch
      %33 = sbr.rel (0) target = $region25
    $region24: #{word_attn_net.1} parent=1 // pred_region
      _
    $region25: #{word_attn_net.1} parent=1 // pred_fallthru
      _
    // Predicated region
    $region26: #{word_attn_net.1} parent=1 // pred_check
      _
    $region27: #{word_attn_net.1} parent=1 // pred_check_branch
      %35 = sbr.rel (0) target = $region29
    $region28: #{word_attn_net.1} parent=1 // pred_region
      _
    $region29: #{word_attn_net.1} parent=1 // pred_fallthru
      _
    // Predicated region
    $region30: #{word_attn_net.1} parent=1 // pred_check
      _
    $region31: #{word_attn_net.1} parent=1 // pred_check_branch
      %37 = sbr.rel (0) target = $region33
    $region32: #{word_attn_net.1} parent=1 // pred_region
      _
    $region33: #{word_attn_net.1} parent=1 // pred_fallthru
      _
    // Predicated region
    $region34: #{word_attn_net.1} parent=1 // pred_check
      _
    $region35: #{word_attn_net.1} parent=1 // pred_check_branch
      %39 = sbr.rel (0) target = $region37
    $region36: #{word_attn_net.1} parent=1 // pred_region
      _
    $region37: #{word_attn_net.1} parent=1 // pred_fallthru
      _
    // Predicated region
    $region38: #{word_attn_net.1} parent=1 // pred_check
      _
    $region39: #{word_attn_net.1} parent=1 // pred_check_branch
      %41 = sbr.rel (0) target = $region41
    $region40: #{word_attn_net.1} parent=1 // pred_region
      _
    $region41: #{word_attn_net.1} parent=1 // pred_fallthru
      _
    // Predicated region
    $region42: #{word_attn_net.1} parent=1 // pred_check
      _
    $region43: #{word_attn_net.1} parent=1 // pred_check_branch
      %43 = sbr.rel (0) target = $region45
    $region44: #{word_attn_net.1} parent=1 // pred_region
      _
    $region45: #{word_attn_net.1} parent=1 // pred_fallthru
      _
    // Predicated region
    $region46: #{word_attn_net.1} parent=1 // pred_check
      _
    $region47: #{word_attn_net.1} parent=1 // pred_check_branch
      %45 = sbr.rel (0) target = $region49
    $region48: #{word_attn_net.1} parent=1 // pred_region
      _
    $region49: #{word_attn_net.1} parent=1 // pred_fallthru
      _
    %v46 = vld [vmem:[%s0] sm:$0xff]
    %v47 = vld [vmem:[%s0 + $0x8] sm:$0xff]
    %v48 = vld [vmem:[%s0 + $0x10] sm:$0xff]
    %v49 = vld [vmem:[%s0 + $0x18] sm:$0xff]
    %v50 = vld [vmem:[%s0 + $0x20] sm:$0xff]
    %v51 = vld [vmem:[%s0 + $0x28] sm:$0xff]
    %v52 = vld [vmem:[%s0 + $0x30] sm:$0xff]
    %v53 = vld [vmem:[%s0 + $0x38] sm:$0xff]
    %v54 = vlaneseq
    %v55 = vand.u32 %v54, 127
    %56 = vset.pattern.permute.xlu0 0
    %57 = vperm.xlu0 %56, %v46
    %v58 = vpop.permute.xlu0 %57
    %59 = vset.pattern.permute.xlu0 0
    %60 = vperm.xlu0 %59, %v47
    %v61 = vpop.permute.xlu0 %60
    %62 = vset.pattern.permute.xlu0 0
    %63 = vperm.xlu0 %62, %v48
    %v64 = vpop.permute.xlu0 %63
    %65 = vset.pattern.permute.xlu0 0
    %66 = vperm.xlu0 %65, %v49
    %v67 = vpop.permute.xlu0 %66
    %68 = vset.pattern.permute.xlu0 0
    %69 = vperm.xlu0 %68, %v50
    %v70 = vpop.permute.xlu0 %69
    %71 = vset.pattern.permute.xlu0 0
    %72 = vperm.xlu0 %71, %v51
    %v73 = vpop.permute.xlu0 %72
    %74 = vset.pattern.permute.xlu0 0
    %75 = vperm.xlu0 %74, %v52
    %v76 = vpop.permute.xlu0 %75
    %77 = vset.pattern.permute.xlu0 0
    %78 = vperm.xlu0 %77, %v53
    %v79 = vpop.permute.xlu0 %78
    %vm80 = vcmp.eq.s32.totalorder %v55, %v58
    %vm81 = vcmp.eq.s32.totalorder %v55, %v61
    %vm82 = vcmp.eq.s32.totalorder %v55, %v64
    %vm83 = vcmp.eq.s32.totalorder %v55, %v67
    %vm84 = vcmp.eq.s32.totalorder %v55, %v70
    %vm85 = vcmp.eq.s32.totalorder %v55, %v73
    %vm86 = vcmp.eq.s32.totalorder %v55, %v76
    %vm87 = vcmp.eq.s32.totalorder %v55, %v79
    %v88 = vsel %vm80, 1, 0
    %v89 = vsel %vm81, 1, 0
    %v90 = vsel %vm82, 1, 0
    %v91 = vsel %vm83, 1, 0
    %v92 = vsel %vm84, 1, 0
    %v93 = vsel %vm85, 1, 0
    %v94 = vsel %vm86, 1, 0
    %v95 = vsel %vm87, 1, 0
    %v96 = vcvt.s32.f32 %v88
    %v97 = vcvt.s32.f32 %v89
    %v98 = vcvt.s32.f32 %v90
    %v99 = vcvt.s32.f32 %v91
    %v100 = vcvt.s32.f32 %v92
    %v101 = vcvt.s32.f32 %v93
    %v102 = vcvt.s32.f32 %v94
    %v103 = vcvt.s32.f32 %v95
    %v104 = vld [vmem:[%s1] sm:$0xff]
    %v105 = vld [vmem:[%s1 + $0x8] sm:$0xff]
    %v106 = vld [vmem:[%s1 + $0x10] sm:$0xff]
    %v107 = vld [vmem:[%s1 + $0x18] sm:$0xff]
    %v108 = vld [vmem:[%s1 + $0x20] sm:$0xff]
    %v109 = vld [vmem:[%s1 + $0x28] sm:$0xff]
    %v110 = vld [vmem:[%s1 + $0x30] sm:$0x3]
    %vm111 = vcmask 408576
    %v113 = vsel %vm111, %v96, 0
    %v116 = vsel %vm111, %v97, 0
    %v119 = vsel %vm111, %v98, 0
    %v122 = vsel %vm111, %v99, 0
    %v125 = vsel %vm111, %v100, 0
    %v128 = vsel %vm111, %v101, 0
    %v131 = vsel %vm111, %v102, 0
    %v134 = vsel %vm111, %v103, 0
    %vm136 = vcmask 1041408
    %v138 = vsel %vm136, %v110, 0
    %140 = vmatprep.subr.mxu0 0.0
    %141 = vmatpush1.msra.mxu0 0.0
    %142 = vmatprep.subr.mxu0 0.0
    %143 = vmatpush1.msra.mxu0 0.0
    %144 = vmatprep.subr.mxu0 0.0
    %145 = vmatpush1.msra.mxu0 0.0
    %146 = vmatprep.subr.mxu0 0.0
    %147 = vmatpush1.msra.mxu0 0.0
    %148 = vmatprep.subr.mxu0 0.0
    %149 = vmatpush1.msra.mxu0 0.0
    %150 = vmatprep.subr.mxu0 0.0
    %151 = vmatpush1.msra.mxu0 0.0
    %152 = vmatprep.subr.mxu0 0.0
    %153 = vmatpush1.msra.mxu0 0.0
    %154 = vmatprep.subr.mxu0 0.0
    %155 = vmatpush1.msra.mxu0 0.0
    %156 = vmatprep.subr.mxu0 0.0
    %157 = vmatpush1.msra.mxu0 0.0
    %158 = vmatprep.subr.mxu0 0.0
    %159 = vmatpush1.msra.mxu0 %v138
    %160 = vmatprep.subr.mxu0 0.0
    %161 = vmatpush1.msra.mxu0 %v109
    %162 = vmatprep.subr.mxu0 0.0
    %163 = vmatpush1.msra.mxu0 %v108
    %164 = vmatprep.subr.mxu0 0.0
    %165 = vmatpush1.msra.mxu0 %v107
    %166 = vmatprep.subr.mxu0 0.0
    %167 = vmatpush1.msra.mxu0 %v106
    %168 = vmatprep.subr.mxu0 0.0
    %169 = vmatpush1.msra.mxu0 %v105
    %170 = vmatprep.subr.mxu0 0.0
    %171 = vmatpush1.msra.mxu0 %v104
    %172 = vmatprep.subr.mxu0 0.0
    %173 = vmatpush2.msra.mxu0 0.0
    %174 = vmatprep.subr.mxu0 0.0
    %175 = vmatpush2.msra.mxu0 0.0
    %176 = vmatprep.subr.mxu0 0.0
    %177 = vmatpush2.msra.mxu0 0.0
    %178 = vmatprep.subr.mxu0 0.0
    %179 = vmatpush2.msra.mxu0 0.0
    %180 = vmatprep.subr.mxu0 0.0
    %181 = vmatpush2.msra.mxu0 0.0
    %182 = vmatprep.subr.mxu0 0.0
    %183 = vmatpush2.msra.mxu0 0.0
    %184 = vmatprep.subr.mxu0 0.0
    %185 = vmatpush2.msra.mxu0 0.0
    %186 = vmatprep.subr.mxu0 0.0
    %187 = vmatpush2.msra.mxu0 0.0
    %188 = vmatprep.subr.mxu0 0.0
    %189 = vmatpush2.msra.mxu0 0.0
    %190 = vmatprep.subr.mxu0 0.0
    %191 = vmatpush2.msra.mxu0 0.0
    %192 = vmatprep.subr.mxu0 0.0
    %193 = vmatpush2.msra.mxu0 0.0
    %194 = vmatprep.subr.mxu0 0.0
    %195 = vmatpush2.msra.mxu0 0.0
    %196 = vmatprep.subr.mxu0 0.0
    %197 = vmatpush2.msra.mxu0 0.0
    %198 = vmatprep.subr.mxu0 0.0
    %199 = vmatpush2.msra.mxu0 0.0
    %200 = vmatprep.subr.mxu0 0.0
    %201 = vmatpush2.msra.mxu0 0.0
    %202 = vmatprep.subr.mxu0 0.0
    %203 = vmatpush2.msra.mxu0 0.0
    %204 = vmatprep.mubr.f32.mxu0 0.0
    %205 = vmatmul.mubr.f32.gmra.mxu0 %v113
    %v206 = vpop.f32.mrf.mxu0
    %v207 = vadd.f32 0.0, %v206
    %v208 = vpop.f32.mrf.mxu0
    %209 = vmatprep.mubr.f32.mxu0 0.0
    %210 = vmatmul.mubr.f32.gmra.mxu0 %v116
    %v211 = vpop.f32.mrf.mxu0
    %v212 = vadd.f32 0.0, %v211
    %v213 = vpop.f32.mrf.mxu0
    %214 = vmatprep.mubr.f32.mxu0 0.0
    %215 = vmatmul.mubr.f32.gmra.mxu0 %v119
    %v216 = vpop.f32.mrf.mxu0
    %v217 = vadd.f32 0.0, %v216
    %v218 = vpop.f32.mrf.mxu0
    %219 = vmatprep.mubr.f32.mxu0 0.0
    %220 = vmatmul.mubr.f32.gmra.mxu0 %v122
    %v221 = vpop.f32.mrf.mxu0
    %v222 = vadd.f32 0.0, %v221
    %v223 = vpop.f32.mrf.mxu0
    %224 = vmatprep.mubr.f32.mxu0 0.0
    %225 = vmatmul.mubr.f32.gmra.mxu0 %v125
    %v226 = vpop.f32.mrf.mxu0
    %v227 = vadd.f32 0.0, %v226
    %v228 = vpop.f32.mrf.mxu0
    %229 = vmatprep.mubr.f32.mxu0 0.0
    %230 = vmatmul.mubr.f32.gmra.mxu0 %v128
    %v231 = vpop.f32.mrf.mxu0
    %v232 = vadd.f32 0.0, %v231
    %v233 = vpop.f32.mrf.mxu0
    %234 = vmatprep.mubr.f32.mxu0 0.0
    %235 = vmatmul.mubr.f32.gmra.mxu0 %v131
    %v236 = vpop.f32.mrf.mxu0
    %v237 = vadd.f32 0.0, %v236
    %v238 = vpop.f32.mrf.mxu0
    %239 = vmatprep.mubr.f32.mxu0 0.0
    %240 = vmatmul.mubr.f32.gmra.mxu0 %v134
    %v241 = vpop.f32.mrf.mxu0
    %v242 = vadd.f32 0.0, %v241
    %v243 = vpop.f32.mrf.mxu0
    %244 = vdwg.mxu0
    %v245 = vld [vmem:[%s2] sm:$0xff]
    %v246 = vld [vmem:[%s2 + $0x8] sm:$0xff]
    %v247 = vld [vmem:[%s3] sm:$0x1]
    %v249 = vlaneseq
    %v250 = vshrl.u32 %v249, 7
    %v251 = vsub.s32 0, %v250
    %v252 = vrot.slane %v247, %v251
    %vm254 = vcmask 130048
    %v256 = vsel %vm254, %v207, 0
    %v259 = vsel %vm254, %v212, 0
    %v262 = vsel %vm254, %v217, 0
    %v265 = vsel %vm254, %v222, 0
    %v268 = vsel %vm254, %v227, 0
    %v271 = vsel %vm254, %v232, 0
    %v274 = vsel %vm254, %v237, 0
    %v277 = vsel %vm254, %v242, 0
    %279 = vmatprep.subr.mxu0 0.0
    %280 = vmatpush1.msra.mxu0 0.0
    %281 = vmatprep.subr.mxu0 0.0
    %282 = vmatpush1.msra.mxu0 0.0
    %283 = vmatprep.subr.mxu0 0.0
    %284 = vmatpush1.msra.mxu0 0.0
    %285 = vmatprep.subr.mxu0 0.0
    %286 = vmatpush1.msra.mxu0 0.0
    %287 = vmatprep.subr.mxu0 0.0
    %288 = vmatpush1.msra.mxu0 0.0
    %289 = vmatprep.subr.mxu0 0.0
    %290 = vmatpush1.msra.mxu0 0.0
    %291 = vmatprep.subr.mxu0 0.0
    %292 = vmatpush1.msra.mxu0 0.0
    %293 = vmatprep.subr.mxu0 0.0
    %294 = vmatpush1.msra.mxu0 0.0
    %295 = vmatprep.subr.mxu0 0.0
    %296 = vmatpush1.msra.mxu0 0.0
    %297 = vmatprep.subr.mxu0 0.0
    %298 = vmatpush1.msra.mxu0 0.0
    %299 = vmatprep.subr.mxu0 0.0
    %300 = vmatpush1.msra.mxu0 0.0
    %301 = vmatprep.subr.mxu0 0.0
    %302 = vmatpush1.msra.mxu0 0.0
    %303 = vmatprep.subr.mxu0 0.0
    %304 = vmatpush1.msra.mxu0 0.0
    %305 = vmatprep.subr.mxu0 0.0
    %306 = vmatpush1.msra.mxu0 0.0
    %307 = vmatprep.subr.mxu0 0.0
    %308 = vmatpush1.msra.mxu0 %v246
    %309 = vmatprep.subr.mxu0 0.0
    %310 = vmatpush1.msra.mxu0 %v245
    %311 = vmatprep.subr.mxu0 0.0
    %312 = vmatpush2.msra.mxu0 0.0
    %313 = vmatprep.subr.mxu0 0.0
    %314 = vmatpush2.msra.mxu0 0.0
    %315 = vmatprep.subr.mxu0 0.0
    %316 = vmatpush2.msra.mxu0 0.0
    %317 = vmatprep.subr.mxu0 0.0
    %318 = vmatpush2.msra.mxu0 0.0
    %319 = vmatprep.subr.mxu0 0.0
    %320 = vmatpush2.msra.mxu0 0.0
    %321 = vmatprep.subr.mxu0 0.0
    %322 = vmatpush2.msra.mxu0 0.0
    %323 = vmatprep.subr.mxu0 0.0
    %324 = vmatpush2.msra.mxu0 0.0
    %325 = vmatprep.subr.mxu0 0.0
    %326 = vmatpush2.msra.mxu0 0.0
    %327 = vmatprep.subr.mxu0 0.0
    %328 = vmatpush2.msra.mxu0 0.0
    %329 = vmatprep.subr.mxu0 0.0
    %330 = vmatpush2.msra.mxu0 0.0
    %331 = vmatprep.subr.mxu0 0.0
    %332 = vmatpush2.msra.mxu0 0.0
    %333 = vmatprep.subr.mxu0 0.0
    %334 = vmatpush2.msra.mxu0 0.0
    %335 = vmatprep.subr.mxu0 0.0
    %336 = vmatpush2.msra.mxu0 0.0
    %337 = vmatprep.subr.mxu0 0.0
    %338 = vmatpush2.msra.mxu0 0.0
    %339 = vmatprep.subr.mxu0 0.0
    %340 = vmatpush2.msra.mxu0 0.0
    %341 = vmatprep.subr.mxu0 0.0
    %342 = vmatpush2.msra.mxu0 0.0
    %343 = vmatprep.mubr.f32.mxu0 0.0
    %344 = vmatmul.mubr.f32.gmra.mxu0 %v256
    %v345 = vpop.f32.mrf.mxu0
    %v346 = vadd.f32 %v252, %v345
    %v347 = vpop.f32.mrf.mxu0
    %348 = vmatprep.mubr.f32.mxu0 0.0
    %349 = vmatmul.mubr.f32.gmra.mxu0 %v259
    %v350 = vpop.f32.mrf.mxu0
    %v351 = vadd.f32 %v252, %v350
    %v352 = vpop.f32.mrf.mxu0
    %353 = vmatprep.mubr.f32.mxu0 0.0
    %354 = vmatmul.mubr.f32.gmra.mxu0 %v262
    %v355 = vpop.f32.mrf.mxu0
    %v356 = vadd.f32 %v252, %v355
    %v357 = vpop.f32.mrf.mxu0
    %358 = vmatprep.mubr.f32.mxu0 0.0
    %359 = vmatmul.mubr.f32.gmra.mxu0 %v265
    %v360 = vpop.f32.mrf.mxu0
    %v361 = vadd.f32 %v252, %v360
    %v362 = vpop.f32.mrf.mxu0
    %363 = vmatprep.mubr.f32.mxu0 0.0
    %364 = vmatmul.mubr.f32.gmra.mxu0 %v268
    %v365 = vpop.f32.mrf.mxu0
    %v366 = vadd.f32 %v252, %v365
    %v367 = vpop.f32.mrf.mxu0
    %368 = vmatprep.mubr.f32.mxu0 0.0
    %369 = vmatmul.mubr.f32.gmra.mxu0 %v271
    %v370 = vpop.f32.mrf.mxu0
    %v371 = vadd.f32 %v252, %v370
    %v372 = vpop.f32.mrf.mxu0
    %373 = vmatprep.mubr.f32.mxu0 0.0
    %374 = vmatmul.mubr.f32.gmra.mxu0 %v274
    %v375 = vpop.f32.mrf.mxu0
    %v376 = vadd.f32 %v252, %v375
    %v377 = vpop.f32.mrf.mxu0
    %378 = vmatprep.mubr.f32.mxu0 0.0
    %379 = vmatmul.mubr.f32.gmra.mxu0 %v277
    %v380 = vpop.f32.mrf.mxu0
    %v381 = vadd.f32 %v252, %v380
    %v382 = vpop.f32.mrf.mxu0
    %383 = vdwg.mxu0
    %v384 = vld [vmem:[%s4] sm:$0xff]
    %v385 = vld [vmem:[%s4 + $0x8] sm:$0xff]
    %v386 = vld [vmem:[%s4 + $0x10] sm:$0xff]
    %v387 = vld [vmem:[%s4 + $0x18] sm:$0xff]
    %v388 = vld [vmem:[%s5] sm:$0x1]
    %v390 = vlaneseq
    %v391 = vshrl.u32 %v390, 7
    %v392 = vsub.s32 0, %v391
    %v393 = vrot.slane %v388, %v392
    %vm395 = vcmask 261120
    %v397 = vsel %vm395, 0.0, 0
    %399 = vmatprep.subr.mxu0 0.0
    %400 = vmatpush1.msra.mxu0 0.0
    %401 = vmatprep.subr.mxu0 0.0
    %402 = vmatpush1.msra.mxu0 0.0
    %403 = vmatprep.subr.mxu0 0.0
    %404 = vmatpush1.msra.mxu0 0.0
    %405 = vmatprep.subr.mxu0 0.0
    %406 = vmatpush1.msra.mxu0 0.0
    %407 = vmatprep.subr.mxu0 0.0
    %408 = vmatpush1.msra.mxu0 0.0
    %409 = vmatprep.subr.mxu0 0.0
    %410 = vmatpush1.msra.mxu0 0.0
    %411 = vmatprep.subr.mxu0 0.0
    %412 = vmatpush1.msra.mxu0 0.0
    %413 = vmatprep.subr.mxu0 0.0
    %414 = vmatpush1.msra.mxu0 0.0
    %415 = vmatprep.subr.mxu0 0.0
    %416 = vmatpush1.msra.mxu0 0.0
    %417 = vmatprep.subr.mxu0 0.0
    %418 = vmatpush1.msra.mxu0 0.0
    %419 = vmatprep.subr.mxu0 0.0
    %420 = vmatpush1.msra.mxu0 0.0
    %421 = vmatprep.subr.mxu0 0.0
    %422 = vmatpush1.msra.mxu0 0.0
    %423 = vmatprep.subr.mxu0 0.0
    %424 = vmatpush1.msra.mxu0 %v387
    %425 = vmatprep.subr.mxu0 0.0
    %426 = vmatpush1.msra.mxu0 %v386
    %427 = vmatprep.subr.mxu0 0.0
    %428 = vmatpush1.msra.mxu0 %v385
    %429 = vmatprep.subr.mxu0 0.0
    %430 = vmatpush1.msra.mxu0 %v384
    %431 = vmatprep.subr.mxu0 0.0
    %432 = vmatpush2.msra.mxu0 0.0
    %433 = vmatprep.subr.mxu0 0.0
    %434 = vmatpush2.msra.mxu0 0.0
    %435 = vmatprep.subr.mxu0 0.0
    %436 = vmatpush2.msra.mxu0 0.0
    %437 = vmatprep.subr.mxu0 0.0
    %438 = vmatpush2.msra.mxu0 0.0
    %439 = vmatprep.subr.mxu0 0.0
    %440 = vmatpush2.msra.mxu0 0.0
    %441 = vmatprep.subr.mxu0 0.0
    %442 = vmatpush2.msra.mxu0 0.0
    %443 = vmatprep.subr.mxu0 0.0
    %444 = vmatpush2.msra.mxu0 0.0
    %445 = vmatprep.subr.mxu0 0.0
    %446 = vmatpush2.msra.mxu0 0.0
    %447 = vmatprep.subr.mxu0 0.0
    %448 = vmatpush2.msra.mxu0 0.0
    %449 = vmatprep.subr.mxu0 0.0
    %450 = vmatpush2.msra.mxu0 0.0
    %451 = vmatprep.subr.mxu0 0.0
    %452 = vmatpush2.msra.mxu0 0.0
    %453 = vmatprep.subr.mxu0 0.0
    %454 = vmatpush2.msra.mxu0 0.0
    %455 = vmatprep.subr.mxu0 0.0
    %456 = vmatpush2.msra.mxu0 0.0
    %457 = vmatprep.subr.mxu0 0.0
    %458 = vmatpush2.msra.mxu0 0.0
    %459 = vmatprep.subr.mxu0 0.0
    %460 = vmatpush2.msra.mxu0 0.0
    %461 = vmatprep.subr.mxu0 0.0
    %462 = vmatpush2.msra.mxu0 0.0
    %463 = vmatprep.mubr.f32.mxu0 0.0
    %464 = vmatmul.mubr.f32.gmra.mxu0 %v397
    %v465 = vpop.f32.mrf.mxu0
    %v466 = vadd.f32 %v393, %v465
    %v467 = vpop.f32.mrf.mxu0
    %468 = vdwg.mxu0
    %v469 = vadd.f32 %v346, %v466
    %v470 = vxor.u32 %v469, 2147483648
    %v471 = vmul.f32 %v470, 1.442695
    %v472 = vpow.pop %v471
    %v473 = vadd.f32 %v472, 1.0
    %v474 = vrcp.pop %v473
    %v475 = vmul.f32 1.0, %v474
    %477 = vrot.lane.b32.xlu0 %v466, 96
    %v478 = vpop.permute.xlu0 %477
    %v480 = vmul.f32 %v475, %v478
    %482 = vrot.lane.b32.xlu0 %v480, 32
    %v483 = vpop.permute.xlu0 %482
    %v485 = vadd.f32 %v346, %v483
    %v486 = vtanh.pop %v485
    %v487 = vsub.f32 1.0, %v475
    %489 = vrot.lane.b32.xlu0 %v486, 112
    %v490 = vpop.permute.xlu0 %489
    %v492 = vmul.f32 %v487, %v490
    %v493 = vmul.f32 %v475, 0.0
    %v494 = vadd.f32 %v492, %v493
    %v495 = vadd.f32 %v381, %v466
    %v496 = vxor.u32 %v495, 2147483648
    %v497 = vmul.f32 %v496, 1.442695
    %v498 = vpow.pop %v497
    %v499 = vadd.f32 %v498, 1.0
    %v500 = vrcp.pop %v499
    %v501 = vmul.f32 1.0, %v500
    %v502 = vmul.f32 %v501, %v478
    %504 = vrot.lane.b32.xlu0 %v502, 32
    %v505 = vpop.permute.xlu0 %504
    %v507 = vadd.f32 %v381, %v505
    %v508 = vtanh.pop %v507
    %v509 = vsub.f32 1.0, %v501
    %511 = vrot.lane.b32.xlu0 %v508, 112
    %v512 = vpop.permute.xlu0 %511
    %v514 = vmul.f32 %v509, %v512
    %v515 = vmul.f32 %v501, 0.0
    %v516 = vadd.f32 %v514, %v515
    %518 = vrot.lane.b32.xlu0 %v494, 112
    %v519 = vpop.permute.xlu0 %518
    %522 = vrot.lane.b32.xlu0 %v516, 80
    %v523 = vpop.permute.xlu0 %522
    %v525 = vsel %vm254, %v519, %v523
    %v527 = vsel %vm395, %v525, 0
    %529 = vmatprep.subr.mxu0 0.0
    %530 = vmatpush1.msra.mxu0 0.0
    %531 = vmatprep.subr.mxu0 0.0
    %532 = vmatpush1.msra.mxu0 0.0
    %533 = vmatprep.subr.mxu0 0.0
    %534 = vmatpush1.msra.mxu0 0.0
    %535 = vmatprep.subr.mxu0 0.0
    %536 = vmatpush1.msra.mxu0 0.0
    %537 = vmatprep.subr.mxu0 0.0
    %538 = vmatpush1.msra.mxu0 0.0
    %539 = vmatprep.subr.mxu0 0.0
    %540 = vmatpush1.msra.mxu0 0.0
    %541 = vmatprep.subr.mxu0 0.0
    %542 = vmatpush1.msra.mxu0 0.0
    %543 = vmatprep.subr.mxu0 0.0
    %544 = vmatpush1.msra.mxu0 0.0
    %545 = vmatprep.subr.mxu0 0.0
    %546 = vmatpush1.msra.mxu0 0.0
    %547 = vmatprep.subr.mxu0 0.0
    %548 = vmatpush1.msra.mxu0 0.0
    %549 = vmatprep.subr.mxu0 0.0
    %550 = vmatpush1.msra.mxu0 0.0
    %551 = vmatprep.subr.mxu0 0.0
    %552 = vmatpush1.msra.mxu0 0.0
    %553 = vmatprep.subr.mxu0 0.0
    %554 = vmatpush1.msra.mxu0 %v387
    %555 = vmatprep.subr.mxu0 0.0
    %556 = vmatpush1.msra.mxu0 %v386
    %557 = vmatprep.subr.mxu0 0.0
    %558 = vmatpush1.msra.mxu0 %v385
    %559 = vmatprep.subr.mxu0 0.0
    %560 = vmatpush1.msra.mxu0 %v384
    %561 = vmatprep.subr.mxu0 0.0
    %562 = vmatpush2.msra.mxu0 0.0
    %563 = vmatprep.subr.mxu0 0.0
    %564 = vmatpush2.msra.mxu0 0.0
    %565 = vmatprep.subr.mxu0 0.0
    %566 = vmatpush2.msra.mxu0 0.0
    %567 = vmatprep.subr.mxu0 0.0
    %568 = vmatpush2.msra.mxu0 0.0
    %569 = vmatprep.subr.mxu0 0.0
    %570 = vmatpush2.msra.mxu0 0.0
    %571 = vmatprep.subr.mxu0 0.0
    %572 = vmatpush2.msra.mxu0 0.0
    %573 = vmatprep.subr.mxu0 0.0
    %574 = vmatpush2.msra.mxu0 0.0
    %575 = vmatprep.subr.mxu0 0.0
    %576 = vmatpush2.msra.mxu0 0.0
    %577 = vmatprep.subr.mxu0 0.0
    %578 = vmatpush2.msra.mxu0 0.0
    %579 = vmatprep.subr.mxu0 0.0
    %580 = vmatpush2.msra.mxu0 0.0
    %581 = vmatprep.subr.mxu0 0.0
    %582 = vmatpush2.msra.mxu0 0.0
    %583 = vmatprep.subr.mxu0 0.0
    %584 = vmatpush2.msra.mxu0 0.0
    %585 = vmatprep.subr.mxu0 0.0
    %586 = vmatpush2.msra.mxu0 0.0
    %587 = vmatprep.subr.mxu0 0.0
    %588 = vmatpush2.msra.mxu0 0.0
    %589 = vmatprep.subr.mxu0 0.0
    %590 = vmatpush2.msra.mxu0 0.0
    %591 = vmatprep.subr.mxu0 0.0
    %592 = vmatpush2.msra.mxu0 0.0
    %593 = vmatprep.mubr.f32.mxu0 0.0
    %594 = vmatmul.mubr.f32.gmra.mxu0 %v527
    %v595 = vpop.f32.mrf.mxu0
    %v596 = vadd.f32 %v393, %v595
    %v597 = vpop.f32.mrf.mxu0
    %598 = vdwg.mxu0
    %v599 = vadd.f32 %v351, %v596
    %v600 = vxor.u32 %v599, 2147483648
    %v601 = vmul.f32 %v600, 1.442695
    %v602 = vpow.pop %v601
    %v603 = vadd.f32 %v602, 1.0
    %v604 = vrcp.pop %v603
    %v605 = vmul.f32 1.0, %v604
    %607 = vrot.lane.b32.xlu0 %v596, 96
    %v608 = vpop.permute.xlu0 %607
    %v610 = vmul.f32 %v605, %v608
    %612 = vrot.lane.b32.xlu0 %v610, 32
    %v613 = vpop.permute.xlu0 %612
    %v615 = vadd.f32 %v351, %v613
    %v616 = vtanh.pop %v615
    %v617 = vsub.f32 1.0, %v605
    %619 = vrot.lane.b32.xlu0 %v616, 112
    %v620 = vpop.permute.xlu0 %619
    %v622 = vmul.f32 %v617, %v620
    %v623 = vmul.f32 %v605, %v494
    %v624 = vadd.f32 %v622, %v623
    %v625 = vadd.f32 %v376, %v596
    %v626 = vxor.u32 %v625, 2147483648
    %v627 = vmul.f32 %v626, 1.442695
    %v628 = vpow.pop %v627
    %v629 = vadd.f32 %v628, 1.0
    %v630 = vrcp.pop %v629
    %v631 = vmul.f32 1.0, %v630
    %v632 = vmul.f32 %v631, %v608
    %634 = vrot.lane.b32.xlu0 %v632, 32
    %v635 = vpop.permute.xlu0 %634
    %v637 = vadd.f32 %v376, %v635
    %v638 = vtanh.pop %v637
    %v639 = vsub.f32 1.0, %v631
    %641 = vrot.lane.b32.xlu0 %v638, 112
    %v642 = vpop.permute.xlu0 %641
    %v644 = vmul.f32 %v639, %v642
    %v645 = vmul.f32 %v631, %v516
    %v646 = vadd.f32 %v644, %v645
    %648 = vrot.lane.b32.xlu0 %v624, 112
    %v649 = vpop.permute.xlu0 %648
    %652 = vrot.lane.b32.xlu0 %v646, 80
    %v653 = vpop.permute.xlu0 %652
    %v655 = vsel %vm254, %v649, %v653
    %v657 = vsel %vm395, %v655, 0
    %659 = vmatprep.subr.mxu0 0.0
    %660 = vmatpush1.msra.mxu0 0.0
    %661 = vmatprep.subr.mxu0 0.0
    %662 = vmatpush1.msra.mxu0 0.0
    %663 = vmatprep.subr.mxu0 0.0
    %664 = vmatpush1.msra.mxu0 0.0
    %665 = vmatprep.subr.mxu0 0.0
    %666 = vmatpush1.msra.mxu0 0.0
    %667 = vmatprep.subr.mxu0 0.0
    %668 = vmatpush1.msra.mxu0 0.0
    %669 = vmatprep.subr.mxu0 0.0
    %670 = vmatpush1.msra.mxu0 0.0
    %671 = vmatprep.subr.mxu0 0.0
    %672 = vmatpush1.msra.mxu0 0.0
    %673 = vmatprep.subr.mxu0 0.0
    %674 = vmatpush1.msra.mxu0 0.0
    %675 = vmatprep.subr.mxu0 0.0
    %676 = vmatpush1.msra.mxu0 0.0
    %677 = vmatprep.subr.mxu0 0.0
    %678 = vmatpush1.msra.mxu0 0.0
    %679 = vmatprep.subr.mxu0 0.0
    %680 = vmatpush1.msra.mxu0 0.0
    %681 = vmatprep.subr.mxu0 0.0
    %682 = vmatpush1.msra.mxu0 0.0
    %683 = vmatprep.subr.mxu0 0.0
    %684 = vmatpush1.msra.mxu0 %v387
    %685 = vmatprep.subr.mxu0 0.0
    %686 = vmatpush1.msra.mxu0 %v386
    %687 = vmatprep.subr.mxu0 0.0
    %688 = vmatpush1.msra.mxu0 %v385
    %689 = vmatprep.subr.mxu0 0.0
    %690 = vmatpush1.msra.mxu0 %v384
    %691 = vmatprep.subr.mxu0 0.0
    %692 = vmatpush2.msra.mxu0 0.0
    %693 = vmatprep.subr.mxu0 0.0
    %694 = vmatpush2.msra.mxu0 0.0
    %695 = vmatprep.subr.mxu0 0.0
    %696 = vmatpush2.msra.mxu0 0.0
    %697 = vmatprep.subr.mxu0 0.0
    %698 = vmatpush2.msra.mxu0 0.0
    %699 = vmatprep.subr.mxu0 0.0
    %700 = vmatpush2.msra.mxu0 0.0
    %701 = vmatprep.subr.mxu0 0.0
    %702 = vmatpush2.msra.mxu0 0.0
    %703 = vmatprep.subr.mxu0 0.0
    %704 = vmatpush2.msra.mxu0 0.0
    %705 = vmatprep.subr.mxu0 0.0
    %706 = vmatpush2.msra.mxu0 0.0
    %707 = vmatprep.subr.mxu0 0.0
    %708 = vmatpush2.msra.mxu0 0.0
    %709 = vmatprep.subr.mxu0 0.0
    %710 = vmatpush2.msra.mxu0 0.0
    %711 = vmatprep.subr.mxu0 0.0
    %712 = vmatpush2.msra.mxu0 0.0
    %713 = vmatprep.subr.mxu0 0.0
    %714 = vmatpush2.msra.mxu0 0.0
    %715 = vmatprep.subr.mxu0 0.0
    %716 = vmatpush2.msra.mxu0 0.0
    %717 = vmatprep.subr.mxu0 0.0
    %718 = vmatpush2.msra.mxu0 0.0
    %719 = vmatprep.subr.mxu0 0.0
    %720 = vmatpush2.msra.mxu0 0.0
    %721 = vmatprep.subr.mxu0 0.0
    %722 = vmatpush2.msra.mxu0 0.0
    %723 = vmatprep.mubr.f32.mxu0 0.0
    %724 = vmatmul.mubr.f32.gmra.mxu0 %v657
    %v725 = vpop.f32.mrf.mxu0
    %v726 = vadd.f32 %v393, %v725
    %v727 = vpop.f32.mrf.mxu0
    %728 = vdwg.mxu0
    %v729 = vadd.f32 %v356, %v726
    %v730 = vxor.u32 %v729, 2147483648
    %v731 = vmul.f32 %v730, 1.442695
    %v732 = vpow.pop %v731
    %v733 = vadd.f32 %v732, 1.0
    %v734 = vrcp.pop %v733
    %v735 = vmul.f32 1.0, %v734
    %737 = vrot.lane.b32.xlu0 %v726, 96
    %v738 = vpop.permute.xlu0 %737
    %v740 = vmul.f32 %v735, %v738
    %742 = vrot.lane.b32.xlu0 %v740, 32
    %v743 = vpop.permute.xlu0 %742
    %v745 = vadd.f32 %v356, %v743
    %v746 = vtanh.pop %v745
    %v747 = vsub.f32 1.0, %v735
    %749 = vrot.lane.b32.xlu0 %v746, 112
    %v750 = vpop.permute.xlu0 %749
    %v752 = vmul.f32 %v747, %v750
    %v753 = vmul.f32 %v735, %v624
    %v754 = vadd.f32 %v752, %v753
    %v755 = vadd.f32 %v371, %v726
    %v756 = vxor.u32 %v755, 2147483648
    %v757 = vmul.f32 %v756, 1.442695
    %v758 = vpow.pop %v757
    %v759 = vadd.f32 %v758, 1.0
    %v760 = vrcp.pop %v759
    %v761 = vmul.f32 1.0, %v760
    %v762 = vmul.f32 %v761, %v738
    %764 = vrot.lane.b32.xlu0 %v762, 32
    %v765 = vpop.permute.xlu0 %764
    %v767 = vadd.f32 %v371, %v765
    %v768 = vtanh.pop %v767
    %v769 = vsub.f32 1.0, %v761
    %771 = vrot.lane.b32.xlu0 %v768, 112
    %v772 = vpop.permute.xlu0 %771
    %v774 = vmul.f32 %v769, %v772
    %v775 = vmul.f32 %v761, %v646
    %v776 = vadd.f32 %v774, %v775
    %778 = vrot.lane.b32.xlu0 %v754, 112
    %v779 = vpop.permute.xlu0 %778
    %782 = vrot.lane.b32.xlu0 %v776, 80
    %v783 = vpop.permute.xlu0 %782
    %v785 = vsel %vm254, %v779, %v783
    %v787 = vsel %vm395, %v785, 0
    %789 = vmatprep.subr.mxu0 0.0
    %790 = vmatpush1.msra.mxu0 0.0
    %791 = vmatprep.subr.mxu0 0.0
    %792 = vmatpush1.msra.mxu0 0.0
    %793 = vmatprep.subr.mxu0 0.0
    %794 = vmatpush1.msra.mxu0 0.0
    %795 = vmatprep.subr.mxu0 0.0
    %796 = vmatpush1.msra.mxu0 0.0
    %797 = vmatprep.subr.mxu0 0.0
    %798 = vmatpush1.msra.mxu0 0.0
    %799 = vmatprep.subr.mxu0 0.0
    %800 = vmatpush1.msra.mxu0 0.0
    %801 = vmatprep.subr.mxu0 0.0
    %802 = vmatpush1.msra.mxu0 0.0
    %803 = vmatprep.subr.mxu0 0.0
    %804 = vmatpush1.msra.mxu0 0.0
    %805 = vmatprep.subr.mxu0 0.0
    %806 = vmatpush1.msra.mxu0 0.0
    %807 = vmatprep.subr.mxu0 0.0
    %808 = vmatpush1.msra.mxu0 0.0
    %809 = vmatprep.subr.mxu0 0.0
    %810 = vmatpush1.msra.mxu0 0.0
    %811 = vmatprep.subr.mxu0 0.0
    %812 = vmatpush1.msra.mxu0 0.0
    %813 = vmatprep.subr.mxu0 0.0
    %814 = vmatpush1.msra.mxu0 %v387
    %815 = vmatprep.subr.mxu0 0.0
    %816 = vmatpush1.msra.mxu0 %v386
    %817 = vmatprep.subr.mxu0 0.0
    %818 = vmatpush1.msra.mxu0 %v385
    %819 = vmatprep.subr.mxu0 0.0
    %820 = vmatpush1.msra.mxu0 %v384
    %821 = vmatprep.subr.mxu0 0.0
    %822 = vmatpush2.msra.mxu0 0.0
    %823 = vmatprep.subr.mxu0 0.0
    %824 = vmatpush2.msra.mxu0 0.0
    %825 = vmatprep.subr.mxu0 0.0
    %826 = vmatpush2.msra.mxu0 0.0
    %827 = vmatprep.subr.mxu0 0.0
    %828 = vmatpush2.msra.mxu0 0.0
    %829 = vmatprep.subr.mxu0 0.0
    %830 = vmatpush2.msra.mxu0 0.0
    %831 = vmatprep.subr.mxu0 0.0
    %832 = vmatpush2.msra.mxu0 0.0
    %833 = vmatprep.subr.mxu0 0.0
    %834 = vmatpush2.msra.mxu0 0.0
    %835 = vmatprep.subr.mxu0 0.0
    %836 = vmatpush2.msra.mxu0 0.0
    %837 = vmatprep.subr.mxu0 0.0
    %838 = vmatpush2.msra.mxu0 0.0
    %839 = vmatprep.subr.mxu0 0.0
    %840 = vmatpush2.msra.mxu0 0.0
    %841 = vmatprep.subr.mxu0 0.0
    %842 = vmatpush2.msra.mxu0 0.0
    %843 = vmatprep.subr.mxu0 0.0
    %844 = vmatpush2.msra.mxu0 0.0
    %845 = vmatprep.subr.mxu0 0.0
    %846 = vmatpush2.msra.mxu0 0.0
    %847 = vmatprep.subr.mxu0 0.0
    %848 = vmatpush2.msra.mxu0 0.0
    %849 = vmatprep.subr.mxu0 0.0
    %850 = vmatpush2.msra.mxu0 0.0
    %851 = vmatprep.subr.mxu0 0.0
    %852 = vmatpush2.msra.mxu0 0.0
    %853 = vmatprep.mubr.f32.mxu0 0.0
    %854 = vmatmul.mubr.f32.gmra.mxu0 %v787
    %v855 = vpop.f32.mrf.mxu0
    %v856 = vadd.f32 %v393, %v855
    %v857 = vpop.f32.mrf.mxu0
    %858 = vdwg.mxu0
    %v859 = vadd.f32 %v361, %v856
    %v860 = vxor.u32 %v859, 2147483648
    %v861 = vmul.f32 %v860, 1.442695
    %v862 = vpow.pop %v861
    %v863 = vadd.f32 %v862, 1.0
    %v864 = vrcp.pop %v863
    %v865 = vmul.f32 1.0, %v864
    %867 = vrot.lane.b32.xlu0 %v856, 96
    %v868 = vpop.permute.xlu0 %867
    %v870 = vmul.f32 %v865, %v868
    %872 = vrot.lane.b32.xlu0 %v870, 32
    %v873 = vpop.permute.xlu0 %872
    %v875 = vadd.f32 %v361, %v873
    %v876 = vtanh.pop %v875
    %v877 = vsub.f32 1.0, %v865
    %879 = vrot.lane.b32.xlu0 %v876, 112
    %v880 = vpop.permute.xlu0 %879
    %v882 = vmul.f32 %v877, %v880
    %v883 = vmul.f32 %v865, %v754
    %v884 = vadd.f32 %v882, %v883
    %v885 = vadd.f32 %v366, %v856
    %v886 = vxor.u32 %v885, 2147483648
    %v887 = vmul.f32 %v886, 1.442695
    %v888 = vpow.pop %v887
    %v889 = vadd.f32 %v888, 1.0
    %v890 = vrcp.pop %v889
    %v891 = vmul.f32 1.0, %v890
    %v892 = vmul.f32 %v891, %v868
    %894 = vrot.lane.b32.xlu0 %v892, 32
    %v895 = vpop.permute.xlu0 %894
    %v897 = vadd.f32 %v366, %v895
    %v898 = vtanh.pop %v897
    %v899 = vsub.f32 1.0, %v891
    %901 = vrot.lane.b32.xlu0 %v898, 112
    %v902 = vpop.permute.xlu0 %901
    %v904 = vmul.f32 %v899, %v902
    %v905 = vmul.f32 %v891, %v776
    %v906 = vadd.f32 %v904, %v905
    %908 = vrot.lane.b32.xlu0 %v884, 112
    %v909 = vpop.permute.xlu0 %908
    %912 = vrot.lane.b32.xlu0 %v906, 80
    %v913 = vpop.permute.xlu0 %912
    %v915 = vsel %vm254, %v909, %v913
    %v917 = vsel %vm395, %v915, 0
    %919 = vmatprep.subr.mxu0 0.0
    %920 = vmatpush1.msra.mxu0 0.0
    %921 = vmatprep.subr.mxu0 0.0
    %922 = vmatpush1.msra.mxu0 0.0
    %923 = vmatprep.subr.mxu0 0.0
    %924 = vmatpush1.msra.mxu0 0.0
    %925 = vmatprep.subr.mxu0 0.0
    %926 = vmatpush1.msra.mxu0 0.0
    %927 = vmatprep.subr.mxu0 0.0
    %928 = vmatpush1.msra.mxu0 0.0
    %929 = vmatprep.subr.mxu0 0.0
    %930 = vmatpush1.msra.mxu0 0.0
    %931 = vmatprep.subr.mxu0 0.0
    %932 = vmatpush1.msra.mxu0 0.0
    %933 = vmatprep.subr.mxu0 0.0
    %934 = vmatpush1.msra.mxu0 0.0
    %935 = vmatprep.subr.mxu0 0.0
    %936 = vmatpush1.msra.mxu0 0.0
    %937 = vmatprep.subr.mxu0 0.0
    %938 = vmatpush1.msra.mxu0 0.0
    %939 = vmatprep.subr.mxu0 0.0
    %940 = vmatpush1.msra.mxu0 0.0
    %941 = vmatprep.subr.mxu0 0.0
    %942 = vmatpush1.msra.mxu0 0.0
    %943 = vmatprep.subr.mxu0 0.0
    %944 = vmatpush1.msra.mxu0 %v387
    %945 = vmatprep.subr.mxu0 0.0
    %946 = vmatpush1.msra.mxu0 %v386
    %947 = vmatprep.subr.mxu0 0.0
    %948 = vmatpush1.msra.mxu0 %v385
    %949 = vmatprep.subr.mxu0 0.0
    %950 = vmatpush1.msra.mxu0 %v384
    %951 = vmatprep.subr.mxu0 0.0
    %952 = vmatpush2.msra.mxu0 0.0
    %953 = vmatprep.subr.mxu0 0.0
    %954 = vmatpush2.msra.mxu0 0.0
    %955 = vmatprep.subr.mxu0 0.0
    %956 = vmatpush2.msra.mxu0 0.0
    %957 = vmatprep.subr.mxu0 0.0
    %958 = vmatpush2.msra.mxu0 0.0
    %959 = vmatprep.subr.mxu0 0.0
    %960 = vmatpush2.msra.mxu0 0.0
    %961 = vmatprep.subr.mxu0 0.0
    %962 = vmatpush2.msra.mxu0 0.0
    %963 = vmatprep.subr.mxu0 0.0
    %964 = vmatpush2.msra.mxu0 0.0
    %965 = vmatprep.subr.mxu0 0.0
    %966 = vmatpush2.msra.mxu0 0.0
    %967 = vmatprep.subr.mxu0 0.0
    %968 = vmatpush2.msra.mxu0 0.0
    %969 = vmatprep.subr.mxu0 0.0
    %970 = vmatpush2.msra.mxu0 0.0
    %971 = vmatprep.subr.mxu0 0.0
    %972 = vmatpush2.msra.mxu0 0.0
    %973 = vmatprep.subr.mxu0 0.0
    %974 = vmatpush2.msra.mxu0 0.0
    %975 = vmatprep.subr.mxu0 0.0
    %976 = vmatpush2.msra.mxu0 0.0
    %977 = vmatprep.subr.mxu0 0.0
    %978 = vmatpush2.msra.mxu0 0.0
    %979 = vmatprep.subr.mxu0 0.0
    %980 = vmatpush2.msra.mxu0 0.0
    %981 = vmatprep.subr.mxu0 0.0
    %982 = vmatpush2.msra.mxu0 0.0
    %983 = vmatprep.mubr.f32.mxu0 0.0
    %984 = vmatmul.mubr.f32.gmra.mxu0 %v917
    %v985 = vpop.f32.mrf.mxu0
    %v986 = vadd.f32 %v393, %v985
    %v987 = vpop.f32.mrf.mxu0
    %988 = vdwg.mxu0
    %v989 = vadd.f32 %v366, %v986
    %v990 = vxor.u32 %v989, 2147483648
    %v991 = vmul.f32 %v990, 1.442695
    %v992 = vpow.pop %v991
    %v993 = vadd.f32 %v992, 1.0
    %v994 = vrcp.pop %v993
    %v995 = vmul.f32 1.0, %v994
    %997 = vrot.lane.b32.xlu0 %v986, 96
    %v998 = vpop.permute.xlu0 %997
    %v1000 = vmul.f32 %v995, %v998
    %1002 = vrot.lane.b32.xlu0 %v1000, 32
    %v1003 = vpop.permute.xlu0 %1002
    %v1005 = vadd.f32 %v366, %v1003
    %v1006 = vtanh.pop %v1005
    %v1007 = vsub.f32 1.0, %v995
    %1009 = vrot.lane.b32.xlu0 %v1006, 112
    %v1010 = vpop.permute.xlu0 %1009
    %v1012 = vmul.f32 %v1007, %v1010
    %v1013 = vmul.f32 %v995, %v884
    %v1014 = vadd.f32 %v1012, %v1013
    %v1015 = vadd.f32 %v361, %v986
    %v1016 = vxor.u32 %v1015, 2147483648
    %v1017 = vmul.f32 %v1016, 1.442695
    %v1018 = vpow.pop %v1017
    %v1019 = vadd.f32 %v1018, 1.0
    %v1020 = vrcp.pop %v1019
    %v1021 = vmul.f32 1.0, %v1020
    %v1022 = vmul.f32 %v1021, %v998
    %1024 = vrot.lane.b32.xlu0 %v1022, 32
    %v1025 = vpop.permute.xlu0 %1024
    %v1027 = vadd.f32 %v361, %v1025
    %v1028 = vtanh.pop %v1027
    %v1029 = vsub.f32 1.0, %v1021
    %1031 = vrot.lane.b32.xlu0 %v1028, 112
    %v1032 = vpop.permute.xlu0 %1031
    %v1034 = vmul.f32 %v1029, %v1032
    %v1035 = vmul.f32 %v1021, %v906
    %v1036 = vadd.f32 %v1034, %v1035
    %1038 = vrot.lane.b32.xlu0 %v1014, 112
    %v1039 = vpop.permute.xlu0 %1038
    %1042 = vrot.lane.b32.xlu0 %v1036, 80
    %v1043 = vpop.permute.xlu0 %1042
    %v1045 = vsel %vm254, %v1039, %v1043
    %v1047 = vsel %vm395, %v1045, 0
    %1049 = vmatprep.subr.mxu0 0.0
    %1050 = vmatpush1.msra.mxu0 0.0
    %1051 = vmatprep.subr.mxu0 0.0
    %1052 = vmatpush1.msra.mxu0 0.0
    %1053 = vmatprep.subr.mxu0 0.0
    %1054 = vmatpush1.msra.mxu0 0.0
    %1055 = vmatprep.subr.mxu0 0.0
    %1056 = vmatpush1.msra.mxu0 0.0
    %1057 = vmatprep.subr.mxu0 0.0
    %1058 = vmatpush1.msra.mxu0 0.0
    %1059 = vmatprep.subr.mxu0 0.0
    %1060 = vmatpush1.msra.mxu0 0.0
    %1061 = vmatprep.subr.mxu0 0.0
    %1062 = vmatpush1.msra.mxu0 0.0
    %1063 = vmatprep.subr.mxu0 0.0
    %1064 = vmatpush1.msra.mxu0 0.0
    %1065 = vmatprep.subr.mxu0 0.0
    %1066 = vmatpush1.msra.mxu0 0.0
    %1067 = vmatprep.subr.mxu0 0.0
    %1068 = vmatpush1.msra.mxu0 0.0
    %1069 = vmatprep.subr.mxu0 0.0
    %1070 = vmatpush1.msra.mxu0 0.0
    %1071 = vmatprep.subr.mxu0 0.0
    %1072 = vmatpush1.msra.mxu0 0.0
    %1073 = vmatprep.subr.mxu0 0.0
    %1074 = vmatpush1.msra.mxu0 %v387
    %1075 = vmatprep.subr.mxu0 0.0
    %1076 = vmatpush1.msra.mxu0 %v386
    %1077 = vmatprep.subr.mxu0 0.0
    %1078 = vmatpush1.msra.mxu0 %v385
    %1079 = vmatprep.subr.mxu0 0.0
    %1080 = vmatpush1.msra.mxu0 %v384
    %1081 = vmatprep.subr.mxu0 0.0
    %1082 = vmatpush2.msra.mxu0 0.0
    %1083 = vmatprep.subr.mxu0 0.0
    %1084 = vmatpush2.msra.mxu0 0.0
    %1085 = vmatprep.subr.mxu0 0.0
    %1086 = vmatpush2.msra.mxu0 0.0
    %1087 = vmatprep.subr.mxu0 0.0
    %1088 = vmatpush2.msra.mxu0 0.0
    %1089 = vmatprep.subr.mxu0 0.0
    %1090 = vmatpush2.msra.mxu0 0.0
    %1091 = vmatprep.subr.mxu0 0.0
    %1092 = vmatpush2.msra.mxu0 0.0
    %1093 = vmatprep.subr.mxu0 0.0
    %1094 = vmatpush2.msra.mxu0 0.0
    %1095 = vmatprep.subr.mxu0 0.0
    %1096 = vmatpush2.msra.mxu0 0.0
    %1097 = vmatprep.subr.mxu0 0.0
    %1098 = vmatpush2.msra.mxu0 0.0
    %1099 = vmatprep.subr.mxu0 0.0
    %1100 = vmatpush2.msra.mxu0 0.0
    %1101 = vmatprep.subr.mxu0 0.0
    %1102 = vmatpush2.msra.mxu0 0.0
    %1103 = vmatprep.subr.mxu0 0.0
    %1104 = vmatpush2.msra.mxu0 0.0
    %1105 = vmatprep.subr.mxu0 0.0
    %1106 = vmatpush2.msra.mxu0 0.0
    %1107 = vmatprep.subr.mxu0 0.0
    %1108 = vmatpush2.msra.mxu0 0.0
    %1109 = vmatprep.subr.mxu0 0.0
    %1110 = vmatpush2.msra.mxu0 0.0
    %1111 = vmatprep.subr.mxu0 0.0
    %1112 = vmatpush2.msra.mxu0 0.0
    %1113 = vmatprep.mubr.f32.mxu0 0.0
    %1114 = vmatmul.mubr.f32.gmra.mxu0 %v1047
    %v1115 = vpop.f32.mrf.mxu0
    %v1116 = vadd.f32 %v393, %v1115
    %v1117 = vpop.f32.mrf.mxu0
    %1118 = vdwg.mxu0
    %v1119 = vadd.f32 %v371, %v1116
    %v1120 = vxor.u32 %v1119, 2147483648
    %v1121 = vmul.f32 %v1120, 1.442695
    %v1122 = vpow.pop %v1121
    %v1123 = vadd.f32 %v1122, 1.0
    %v1124 = vrcp.pop %v1123
    %v1125 = vmul.f32 1.0, %v1124
    %1127 = vrot.lane.b32.xlu0 %v1116, 96
    %v1128 = vpop.permute.xlu0 %1127
    %v1130 = vmul.f32 %v1125, %v1128
    %1132 = vrot.lane.b32.xlu0 %v1130, 32
    %v1133 = vpop.permute.xlu0 %1132
    %v1135 = vadd.f32 %v371, %v1133
    %v1136 = vtanh.pop %v1135
    %v1137 = vsub.f32 1.0, %v1125
    %1139 = vrot.lane.b32.xlu0 %v1136, 112
    %v1140 = vpop.permute.xlu0 %1139
    %v1142 = vmul.f32 %v1137, %v1140
    %v1143 = vmul.f32 %v1125, %v1014
    %v1144 = vadd.f32 %v1142, %v1143
    %v1145 = vadd.f32 %v356, %v1116
    %v1146 = vxor.u32 %v1145, 2147483648
    %v1147 = vmul.f32 %v1146, 1.442695
    %v1148 = vpow.pop %v1147
    %v1149 = vadd.f32 %v1148, 1.0
    %v1150 = vrcp.pop %v1149
    %v1151 = vmul.f32 1.0, %v1150
    %v1152 = vmul.f32 %v1151, %v1128
    %1154 = vrot.lane.b32.xlu0 %v1152, 32
    %v1155 = vpop.permute.xlu0 %1154
    %v1157 = vadd.f32 %v356, %v1155
    %v1158 = vtanh.pop %v1157
    %v1159 = vsub.f32 1.0, %v1151
    %1161 = vrot.lane.b32.xlu0 %v1158, 112
    %v1162 = vpop.permute.xlu0 %1161
    %v1164 = vmul.f32 %v1159, %v1162
    %v1165 = vmul.f32 %v1151, %v1036
    %v1166 = vadd.f32 %v1164, %v1165
    %1168 = vrot.lane.b32.xlu0 %v1144, 112
    %v1169 = vpop.permute.xlu0 %1168
    %1172 = vrot.lane.b32.xlu0 %v1166, 80
    %v1173 = vpop.permute.xlu0 %1172
    %v1175 = vsel %vm254, %v1169, %v1173
    %v1177 = vsel %vm395, %v1175, 0
    %1179 = vmatprep.subr.mxu0 0.0
    %1180 = vmatpush1.msra.mxu0 0.0
    %1181 = vmatprep.subr.mxu0 0.0
    %1182 = vmatpush1.msra.mxu0 0.0
    %1183 = vmatprep.subr.mxu0 0.0
    %1184 = vmatpush1.msra.mxu0 0.0
    %1185 = vmatprep.subr.mxu0 0.0
    %1186 = vmatpush1.msra.mxu0 0.0
    %1187 = vmatprep.subr.mxu0 0.0
    %1188 = vmatpush1.msra.mxu0 0.0
    %1189 = vmatprep.subr.mxu0 0.0
    %1190 = vmatpush1.msra.mxu0 0.0
    %1191 = vmatprep.subr.mxu0 0.0
    %1192 = vmatpush1.msra.mxu0 0.0
    %1193 = vmatprep.subr.mxu0 0.0
    %1194 = vmatpush1.msra.mxu0 0.0
    %1195 = vmatprep.subr.mxu0 0.0
    %1196 = vmatpush1.msra.mxu0 0.0
    %1197 = vmatprep.subr.mxu0 0.0
    %1198 = vmatpush1.msra.mxu0 0.0
    %1199 = vmatprep.subr.mxu0 0.0
    %1200 = vmatpush1.msra.mxu0 0.0
    %1201 = vmatprep.subr.mxu0 0.0
    %1202 = vmatpush1.msra.mxu0 0.0
    %1203 = vmatprep.subr.mxu0 0.0
    %1204 = vmatpush1.msra.mxu0 %v387
    %1205 = vmatprep.subr.mxu0 0.0
    %1206 = vmatpush1.msra.mxu0 %v386
    %1207 = vmatprep.subr.mxu0 0.0
    %1208 = vmatpush1.msra.mxu0 %v385
    %1209 = vmatprep.subr.mxu0 0.0
    %1210 = vmatpush1.msra.mxu0 %v384
    %1211 = vmatprep.subr.mxu0 0.0
    %1212 = vmatpush2.msra.mxu0 0.0
    %1213 = vmatprep.subr.mxu0 0.0
    %1214 = vmatpush2.msra.mxu0 0.0
    %1215 = vmatprep.subr.mxu0 0.0
    %1216 = vmatpush2.msra.mxu0 0.0
    %1217 = vmatprep.subr.mxu0 0.0
    %1218 = vmatpush2.msra.mxu0 0.0
    %1219 = vmatprep.subr.mxu0 0.0
    %1220 = vmatpush2.msra.mxu0 0.0
    %1221 = vmatprep.subr.mxu0 0.0
    %1222 = vmatpush2.msra.mxu0 0.0
    %1223 = vmatprep.subr.mxu0 0.0
    %1224 = vmatpush2.msra.mxu0 0.0
    %1225 = vmatprep.subr.mxu0 0.0
    %1226 = vmatpush2.msra.mxu0 0.0
    %1227 = vmatprep.subr.mxu0 0.0
    %1228 = vmatpush2.msra.mxu0 0.0
    %1229 = vmatprep.subr.mxu0 0.0
    %1230 = vmatpush2.msra.mxu0 0.0
    %1231 = vmatprep.subr.mxu0 0.0
    %1232 = vmatpush2.msra.mxu0 0.0
    %1233 = vmatprep.subr.mxu0 0.0
    %1234 = vmatpush2.msra.mxu0 0.0
    %1235 = vmatprep.subr.mxu0 0.0
    %1236 = vmatpush2.msra.mxu0 0.0
    %1237 = vmatprep.subr.mxu0 0.0
    %1238 = vmatpush2.msra.mxu0 0.0
    %1239 = vmatprep.subr.mxu0 0.0
    %1240 = vmatpush2.msra.mxu0 0.0
    %1241 = vmatprep.subr.mxu0 0.0
    %1242 = vmatpush2.msra.mxu0 0.0
    %1243 = vmatprep.mubr.f32.mxu0 0.0
    %1244 = vmatmul.mubr.f32.gmra.mxu0 %v1177
    %v1245 = vpop.f32.mrf.mxu0
    %v1246 = vadd.f32 %v393, %v1245
    %v1247 = vpop.f32.mrf.mxu0
    %1248 = vdwg.mxu0
    %v1249 = vadd.f32 %v376, %v1246
    %v1250 = vxor.u32 %v1249, 2147483648
    %v1251 = vmul.f32 %v1250, 1.442695
    %v1252 = vpow.pop %v1251
    %v1253 = vadd.f32 %v1252, 1.0
    %v1254 = vrcp.pop %v1253
    %v1255 = vmul.f32 1.0, %v1254
    %1257 = vrot.lane.b32.xlu0 %v1246, 96
    %v1258 = vpop.permute.xlu0 %1257
    %v1260 = vmul.f32 %v1255, %v1258
    %1262 = vrot.lane.b32.xlu0 %v1260, 32
    %v1263 = vpop.permute.xlu0 %1262
    %v1265 = vadd.f32 %v376, %v1263
    %v1266 = vtanh.pop %v1265
    %v1267 = vsub.f32 1.0, %v1255
    %1269 = vrot.lane.b32.xlu0 %v1266, 112
    %v1270 = vpop.permute.xlu0 %1269
    %v1272 = vmul.f32 %v1267, %v1270
    %v1273 = vmul.f32 %v1255, %v1144
    %v1274 = vadd.f32 %v1272, %v1273
    %v1275 = vadd.f32 %v351, %v1246
    %v1276 = vxor.u32 %v1275, 2147483648
    %v1277 = vmul.f32 %v1276, 1.442695
    %v1278 = vpow.pop %v1277
    %v1279 = vadd.f32 %v1278, 1.0
    %v1280 = vrcp.pop %v1279
    %v1281 = vmul.f32 1.0, %v1280
    %v1282 = vmul.f32 %v1281, %v1258
    %1284 = vrot.lane.b32.xlu0 %v1282, 32
    %v1285 = vpop.permute.xlu0 %1284
    %v1287 = vadd.f32 %v351, %v1285
    %v1288 = vtanh.pop %v1287
    %v1289 = vsub.f32 1.0, %v1281
    %1291 = vrot.lane.b32.xlu0 %v1288, 112
    %v1292 = vpop.permute.xlu0 %1291
    %v1294 = vmul.f32 %v1289, %v1292
    %v1295 = vmul.f32 %v1281, %v1166
    %v1296 = vadd.f32 %v1294, %v1295
    %1298 = vrot.lane.b32.xlu0 %v1274, 112
    %v1299 = vpop.permute.xlu0 %1298
    %1302 = vrot.lane.b32.xlu0 %v1296, 80
    %v1303 = vpop.permute.xlu0 %1302
    %v1305 = vsel %vm254, %v1299, %v1303
    %v1307 = vsel %vm395, %v1305, 0
    %1309 = vmatprep.subr.mxu0 0.0
    %1310 = vmatpush1.msra.mxu0 0.0
    %1311 = vmatprep.subr.mxu0 0.0
    %1312 = vmatpush1.msra.mxu0 0.0
    %1313 = vmatprep.subr.mxu0 0.0
    %1314 = vmatpush1.msra.mxu0 0.0
    %1315 = vmatprep.subr.mxu0 0.0
    %1316 = vmatpush1.msra.mxu0 0.0
    %1317 = vmatprep.subr.mxu0 0.0
    %1318 = vmatpush1.msra.mxu0 0.0
    %1319 = vmatprep.subr.mxu0 0.0
    %1320 = vmatpush1.msra.mxu0 0.0
    %1321 = vmatprep.subr.mxu0 0.0
    %1322 = vmatpush1.msra.mxu0 0.0
    %1323 = vmatprep.subr.mxu0 0.0
    %1324 = vmatpush1.msra.mxu0 0.0
    %1325 = vmatprep.subr.mxu0 0.0
    %1326 = vmatpush1.msra.mxu0 0.0
    %1327 = vmatprep.subr.mxu0 0.0
    %1328 = vmatpush1.msra.mxu0 0.0
    %1329 = vmatprep.subr.mxu0 0.0
    %1330 = vmatpush1.msra.mxu0 0.0
    %1331 = vmatprep.subr.mxu0 0.0
    %1332 = vmatpush1.msra.mxu0 0.0
    %1333 = vmatprep.subr.mxu0 0.0
    %1334 = vmatpush1.msra.mxu0 %v387
    %1335 = vmatprep.subr.mxu0 0.0
    %1336 = vmatpush1.msra.mxu0 %v386
    %1337 = vmatprep.subr.mxu0 0.0
    %1338 = vmatpush1.msra.mxu0 %v385
    %1339 = vmatprep.subr.mxu0 0.0
    %1340 = vmatpush1.msra.mxu0 %v384
    %1341 = vmatprep.subr.mxu0 0.0
    %1342 = vmatpush2.msra.mxu0 0.0
    %1343 = vmatprep.subr.mxu0 0.0
    %1344 = vmatpush2.msra.mxu0 0.0
    %1345 = vmatprep.subr.mxu0 0.0
    %1346 = vmatpush2.msra.mxu0 0.0
    %1347 = vmatprep.subr.mxu0 0.0
    %1348 = vmatpush2.msra.mxu0 0.0
    %1349 = vmatprep.subr.mxu0 0.0
    %1350 = vmatpush2.msra.mxu0 0.0
    %1351 = vmatprep.subr.mxu0 0.0
    %1352 = vmatpush2.msra.mxu0 0.0
    %1353 = vmatprep.subr.mxu0 0.0
    %1354 = vmatpush2.msra.mxu0 0.0
    %1355 = vmatprep.subr.mxu0 0.0
    %1356 = vmatpush2.msra.mxu0 0.0
    %1357 = vmatprep.subr.mxu0 0.0
    %1358 = vmatpush2.msra.mxu0 0.0
    %1359 = vmatprep.subr.mxu0 0.0
    %1360 = vmatpush2.msra.mxu0 0.0
    %1361 = vmatprep.subr.mxu0 0.0
    %1362 = vmatpush2.msra.mxu0 0.0
    %1363 = vmatprep.subr.mxu0 0.0
    %1364 = vmatpush2.msra.mxu0 0.0
    %1365 = vmatprep.subr.mxu0 0.0
    %1366 = vmatpush2.msra.mxu0 0.0
    %1367 = vmatprep.subr.mxu0 0.0
    %1368 = vmatpush2.msra.mxu0 0.0
    %1369 = vmatprep.subr.mxu0 0.0
    %1370 = vmatpush2.msra.mxu0 0.0
    %1371 = vmatprep.subr.mxu0 0.0
    %1372 = vmatpush2.msra.mxu0 0.0
    %1373 = vmatprep.mubr.f32.mxu0 0.0
    %1374 = vmatmul.mubr.f32.gmra.mxu0 %v1307
    %v1375 = vpop.f32.mrf.mxu0
    %v1376 = vadd.f32 %v393, %v1375
    %v1377 = vpop.f32.mrf.mxu0
    %1378 = vdwg.mxu0
    %v1379 = vadd.f32 %v381, %v1376
    %v1380 = vxor.u32 %v1379, 2147483648
    %v1381 = vmul.f32 %v1380, 1.442695
    %v1382 = vpow.pop %v1381
    %v1383 = vadd.f32 %v1382, 1.0
    %v1384 = vrcp.pop %v1383
    %v1385 = vmul.f32 1.0, %v1384
    %1387 = vrot.lane.b32.xlu0 %v1376, 96
    %v1388 = vpop.permute.xlu0 %1387
    %v1390 = vmul.f32 %v1385, %v1388
    %1392 = vrot.lane.b32.xlu0 %v1390, 32
    %v1393 = vpop.permute.xlu0 %1392
    %v1395 = vadd.f32 %v381, %v1393
    %v1396 = vtanh.pop %v1395
    %v1397 = vsub.f32 1.0, %v1385
    %1399 = vrot.lane.b32.xlu0 %v1396, 112
    %v1400 = vpop.permute.xlu0 %1399
    %v1402 = vmul.f32 %v1397, %v1400
    %v1403 = vmul.f32 %v1385, %v1274
    %v1404 = vadd.f32 %v1402, %v1403
    %v1405 = vadd.f32 %v346, %v1376
    %v1406 = vxor.u32 %v1405, 2147483648
    %v1407 = vmul.f32 %v1406, 1.442695
    %v1408 = vpow.pop %v1407
    %v1409 = vadd.f32 %v1408, 1.0
    %v1410 = vrcp.pop %v1409
    %v1411 = vmul.f32 1.0, %v1410
    %v1412 = vmul.f32 %v1411, %v1388
    %1414 = vrot.lane.b32.xlu0 %v1412, 32
    %v1415 = vpop.permute.xlu0 %1414
    %v1417 = vadd.f32 %v346, %v1415
    %v1418 = vtanh.pop %v1417
    %v1419 = vsub.f32 1.0, %v1411
    %1421 = vrot.lane.b32.xlu0 %v1418, 112
    %v1422 = vpop.permute.xlu0 %1421
    %v1424 = vmul.f32 %v1419, %v1422
    %v1425 = vmul.f32 %v1411, %v1296
    %v1426 = vadd.f32 %v1424, %v1425
    %1428 = vrot.lane.b32.xlu0 %v1426, 80
    %v1429 = vpop.permute.xlu0 %1428
    %v1431 = vsel %vm254, %v519, %v1429
    %v1432 = vsel %vm254, %v649, %v1303
    %v1433 = vsel %vm254, %v779, %v1173
    %v1434 = vsel %vm254, %v909, %v1043
    %v1435 = vsel %vm254, %v1039, %v913
    %v1436 = vsel %vm254, %v1169, %v783
    %v1437 = vsel %vm254, %v1299, %v653
    %1439 = vrot.lane.b32.xlu0 %v1404, 112
    %v1440 = vpop.permute.xlu0 %1439
    %v1442 = vsel %vm254, %v1440, %v523
    %v1443 = vsel %vm395, %v1431, 0.0
    %1444 = vadd.xlane.f32.xlu0 %v1443
    %v1445 = vpop.xlane.xlu0 %1444
    %v1446 = vsel %vm395, %v1432, 0.0
    %1447 = vadd.xlane.f32.xlu0 %v1446
    %v1448 = vpop.xlane.xlu0 %1447
    %v1449 = vsel %vm395, %v1433, 0.0
    %1450 = vadd.xlane.f32.xlu0 %v1449
    %v1451 = vpop.xlane.xlu0 %1450
    %v1452 = vsel %vm395, %v1434, 0.0
    %1453 = vadd.xlane.f32.xlu0 %v1452
    %v1454 = vpop.xlane.xlu0 %1453
    %v1455 = vsel %vm395, %v1435, 0.0
    %1456 = vadd.xlane.f32.xlu0 %v1455
    %v1457 = vpop.xlane.xlu0 %1456
    %v1458 = vsel %vm395, %v1436, 0.0
    %1459 = vadd.xlane.f32.xlu0 %v1458
    %v1460 = vpop.xlane.xlu0 %1459
    %v1461 = vsel %vm395, %v1437, 0.0
    %1462 = vadd.xlane.f32.xlu0 %v1461
    %v1463 = vpop.xlane.xlu0 %1462
    %v1464 = vsel %vm395, %v1442, 0.0
    %1465 = vadd.xlane.f32.xlu0 %v1464
    %v1466 = vpop.xlane.xlu0 %1465
    %v1467 = vrcp.pop 32.0
    %v1468 = vmul.f32 %v1445, %v1467
    %v1469 = vmul.f32 %v1448, %v1467
    %v1470 = vmul.f32 %v1451, %v1467
    %v1471 = vmul.f32 %v1454, %v1467
    %v1472 = vmul.f32 %v1457, %v1467
    %v1473 = vmul.f32 %v1460, %v1467
    %v1474 = vmul.f32 %v1463, %v1467
    %v1475 = vmul.f32 %v1466, %v1467
    %v1476 = vsub.f32 %v1431, %v1468
    %v1477 = vsub.f32 %v1432, %v1469
    %v1478 = vsub.f32 %v1433, %v1470
    %v1479 = vsub.f32 %v1434, %v1471
    %v1480 = vsub.f32 %v1435, %v1472
    %v1481 = vsub.f32 %v1436, %v1473
    %v1482 = vsub.f32 %v1437, %v1474
    %v1483 = vsub.f32 %v1442, %v1475
    %v1484 = vmul.f32 %v1476, %v1476
    %v1485 = vmul.f32 %v1477, %v1477
    %v1486 = vmul.f32 %v1478, %v1478
    %v1487 = vmul.f32 %v1479, %v1479
    %v1488 = vmul.f32 %v1480, %v1480
    %v1489 = vmul.f32 %v1481, %v1481
    %v1490 = vmul.f32 %v1482, %v1482
    %v1491 = vmul.f32 %v1483, %v1483
    %v1492 = vsel %vm395, %v1484, 0.0
    %1493 = vadd.xlane.f32.xlu0 %v1492
    %v1494 = vpop.xlane.xlu0 %1493
    %v1495 = vsel %vm395, %v1485, 0.0
    %1496 = vadd.xlane.f32.xlu0 %v1495
    %v1497 = vpop.xlane.xlu0 %1496
    %v1498 = vsel %vm395, %v1486, 0.0
    %1499 = vadd.xlane.f32.xlu0 %v1498
    %v1500 = vpop.xlane.xlu0 %1499
    %v1501 = vsel %vm395, %v1487, 0.0
    %1502 = vadd.xlane.f32.xlu0 %v1501
    %v1503 = vpop.xlane.xlu0 %1502
    %v1504 = vsel %vm395, %v1488, 0.0
    %1505 = vadd.xlane.f32.xlu0 %v1504
    %v1506 = vpop.xlane.xlu0 %1505
    %v1507 = vsel %vm395, %v1489, 0.0
    %1508 = vadd.xlane.f32.xlu0 %v1507
    %v1509 = vpop.xlane.xlu0 %1508
    %v1510 = vsel %vm395, %v1490, 0.0
    %1511 = vadd.xlane.f32.xlu0 %v1510
    %v1512 = vpop.xlane.xlu0 %1511
    %v1513 = vsel %vm395, %v1491, 0.0
    %1514 = vadd.xlane.f32.xlu0 %v1513
    %v1515 = vpop.xlane.xlu0 %1514
    %v1516 = vmul.f32 %v1494, %v1467
    %v1517 = vmul.f32 %v1497, %v1467
    %v1518 = vmul.f32 %v1500, %v1467
    %v1519 = vmul.f32 %v1503, %v1467
    %v1520 = vmul.f32 %v1506, %v1467
    %v1521 = vmul.f32 %v1509, %v1467
    %v1522 = vmul.f32 %v1512, %v1467
    %v1523 = vmul.f32 %v1515, %v1467
    %v1524 = vadd.f32 %v1516, 1e-05
    %v1525 = vadd.f32 %v1517, 1e-05
    %v1526 = vadd.f32 %v1518, 1e-05
    %v1527 = vadd.f32 %v1519, 1e-05
    %v1528 = vadd.f32 %v1520, 1e-05
    %v1529 = vadd.f32 %v1521, 1e-05
    %v1530 = vadd.f32 %v1522, 1e-05
    %v1531 = vadd.f32 %v1523, 1e-05
    %v1532 = vrsqrt.pop %v1524
    %v1533 = vrsqrt.pop %v1525
    %v1534 = vrsqrt.pop %v1526
    %v1535 = vrsqrt.pop %v1527
    %v1536 = vrsqrt.pop %v1528
    %v1537 = vrsqrt.pop %v1529
    %v1538 = vrsqrt.pop %v1530
    %v1539 = vrsqrt.pop %v1531
    %v1540 = vmul.f32 %v1476, %v1532
    %v1541 = vmul.f32 %v1477, %v1533
    %v1542 = vmul.f32 %v1478, %v1534
    %v1543 = vmul.f32 %v1479, %v1535
    %v1544 = vmul.f32 %v1480, %v1536
    %v1545 = vmul.f32 %v1481, %v1537
    %v1546 = vmul.f32 %v1482, %v1538
    %v1547 = vmul.f32 %v1483, %v1539
    %v1548 = vld [vmem:[%s6] sm:$0x1]
    %v1550 = vlaneseq
    %v1551 = vshrl.u32 %v1550, 7
    %v1552 = vsub.s32 0, %v1551
    %v1553 = vrot.slane %v1548, %v1552
    %v1555 = vmul.f32 %v1540, %v1553
    %v1556 = vmul.f32 %v1541, %v1553
    %v1557 = vmul.f32 %v1542, %v1553
    %v1558 = vmul.f32 %v1543, %v1553
    %v1559 = vmul.f32 %v1544, %v1553
    %v1560 = vmul.f32 %v1545, %v1553
    %v1561 = vmul.f32 %v1546, %v1553
    %v1562 = vmul.f32 %v1547, %v1553
    %v1563 = vld [vmem:[%s7] sm:$0x1]
    %v1565 = vlaneseq
    %v1566 = vshrl.u32 %v1565, 7
    %v1567 = vsub.s32 0, %v1566
    %v1568 = vrot.slane %v1563, %v1567
    %v1570 = vadd.f32 %v1555, %v1568
    %v1571 = vadd.f32 %v1556, %v1568
    %v1572 = vadd.f32 %v1557, %v1568
    %v1573 = vadd.f32 %v1558, %v1568
    %v1574 = vadd.f32 %v1559, %v1568
    %v1575 = vadd.f32 %v1560, %v1568
    %v1576 = vadd.f32 %v1561, %v1568
    %v1577 = vadd.f32 %v1562, %v1568
    %v1578 = vld [vmem:[%s8] sm:$0xff]
    %v1579 = vld [vmem:[%s8 + $0x8] sm:$0xff]
    %v1580 = vld [vmem:[%s8 + $0x10] sm:$0xff]
    %v1581 = vld [vmem:[%s8 + $0x18] sm:$0xff]
    %v1582 = vld [vmem:[%s9] sm:$0x1]
    %v1584 = vlaneseq
    %v1585 = vshrl.u32 %v1584, 7
    %v1586 = vsub.s32 0, %v1585
    %v1587 = vrot.slane %v1582, %v1586
    %v1590 = vsel %vm395, %v1570, 0
    %v1593 = vsel %vm395, %v1571, 0
    %v1596 = vsel %vm395, %v1572, 0
    %v1599 = vsel %vm395, %v1573, 0
    %v1602 = vsel %vm395, %v1574, 0
    %v1605 = vsel %vm395, %v1575, 0
    %v1608 = vsel %vm395, %v1576, 0
    %v1611 = vsel %vm395, %v1577, 0
    %1613 = vmatprep.subr.mxu0 0.0
    %1614 = vmatpush1.msra.mxu0 0.0
    %1615 = vmatprep.subr.mxu0 0.0
    %1616 = vmatpush1.msra.mxu0 0.0
    %1617 = vmatprep.subr.mxu0 0.0
    %1618 = vmatpush1.msra.mxu0 0.0
    %1619 = vmatprep.subr.mxu0 0.0
    %1620 = vmatpush1.msra.mxu0 0.0
    %1621 = vmatprep.subr.mxu0 0.0
    %1622 = vmatpush1.msra.mxu0 0.0
    %1623 = vmatprep.subr.mxu0 0.0
    %1624 = vmatpush1.msra.mxu0 0.0
    %1625 = vmatprep.subr.mxu0 0.0
    %1626 = vmatpush1.msra.mxu0 0.0
    %1627 = vmatprep.subr.mxu0 0.0
    %1628 = vmatpush1.msra.mxu0 0.0
    %1629 = vmatprep.subr.mxu0 0.0
    %1630 = vmatpush1.msra.mxu0 0.0
    %1631 = vmatprep.subr.mxu0 0.0
    %1632 = vmatpush1.msra.mxu0 0.0
    %1633 = vmatprep.subr.mxu0 0.0
    %1634 = vmatpush1.msra.mxu0 0.0
    %1635 = vmatprep.subr.mxu0 0.0
    %1636 = vmatpush1.msra.mxu0 0.0
    %1637 = vmatprep.subr.mxu0 0.0
    %1638 = vmatpush1.msra.mxu0 %v1581
    %1639 = vmatprep.subr.mxu0 0.0
    %1640 = vmatpush1.msra.mxu0 %v1580
    %1641 = vmatprep.subr.mxu0 0.0
    %1642 = vmatpush1.msra.mxu0 %v1579
    %1643 = vmatprep.subr.mxu0 0.0
    %1644 = vmatpush1.msra.mxu0 %v1578
    %1645 = vmatprep.subr.mxu0 0.0
    %1646 = vmatpush2.msra.mxu0 0.0
    %1647 = vmatprep.subr.mxu0 0.0
    %1648 = vmatpush2.msra.mxu0 0.0
    %1649 = vmatprep.subr.mxu0 0.0
    %1650 = vmatpush2.msra.mxu0 0.0
    %1651 = vmatprep.subr.mxu0 0.0
    %1652 = vmatpush2.msra.mxu0 0.0
    %1653 = vmatprep.subr.mxu0 0.0
    %1654 = vmatpush2.msra.mxu0 0.0
    %1655 = vmatprep.subr.mxu0 0.0
    %1656 = vmatpush2.msra.mxu0 0.0
    %1657 = vmatprep.subr.mxu0 0.0
    %1658 = vmatpush2.msra.mxu0 0.0
    %1659 = vmatprep.subr.mxu0 0.0
    %1660 = vmatpush2.msra.mxu0 0.0
    %1661 = vmatprep.subr.mxu0 0.0
    %1662 = vmatpush2.msra.mxu0 0.0
    %1663 = vmatprep.subr.mxu0 0.0
    %1664 = vmatpush2.msra.mxu0 0.0
    %1665 = vmatprep.subr.mxu0 0.0
    %1666 = vmatpush2.msra.mxu0 0.0
    %1667 = vmatprep.subr.mxu0 0.0
    %1668 = vmatpush2.msra.mxu0 0.0
    %1669 = vmatprep.subr.mxu0 0.0
    %1670 = vmatpush2.msra.mxu0 0.0
    %1671 = vmatprep.subr.mxu0 0.0
    %1672 = vmatpush2.msra.mxu0 0.0
    %1673 = vmatprep.subr.mxu0 0.0
    %1674 = vmatpush2.msra.mxu0 0.0
    %1675 = vmatprep.subr.mxu0 0.0
    %1676 = vmatpush2.msra.mxu0 0.0
    %1677 = vmatprep.mubr.f32.mxu0 0.0
    %1678 = vmatmul.mubr.f32.gmra.mxu0 %v1590
    %v1679 = vpop.f32.mrf.mxu0
    %v1680 = vadd.f32 %v1587, %v1679
    %v1681 = vpop.f32.mrf.mxu0
    %1682 = vmatprep.mubr.f32.mxu0 0.0
    %1683 = vmatmul.mubr.f32.gmra.mxu0 %v1593
    %v1684 = vpop.f32.mrf.mxu0
    %v1685 = vadd.f32 %v1587, %v1684
    %v1686 = vpop.f32.mrf.mxu0
    %1687 = vmatprep.mubr.f32.mxu0 0.0
    %1688 = vmatmul.mubr.f32.gmra.mxu0 %v1596
    %v1689 = vpop.f32.mrf.mxu0
    %v1690 = vadd.f32 %v1587, %v1689
    %v1691 = vpop.f32.mrf.mxu0
    %1692 = vmatprep.mubr.f32.mxu0 0.0
    %1693 = vmatmul.mubr.f32.gmra.mxu0 %v1599
    %v1694 = vpop.f32.mrf.mxu0
    %v1695 = vadd.f32 %v1587, %v1694
    %v1696 = vpop.f32.mrf.mxu0
    %1697 = vmatprep.mubr.f32.mxu0 0.0
    %1698 = vmatmul.mubr.f32.gmra.mxu0 %v1602
    %v1699 = vpop.f32.mrf.mxu0
    %v1700 = vadd.f32 %v1587, %v1699
    %v1701 = vpop.f32.mrf.mxu0
    %1702 = vmatprep.mubr.f32.mxu0 0.0
    %1703 = vmatmul.mubr.f32.gmra.mxu0 %v1605
    %v1704 = vpop.f32.mrf.mxu0
    %v1705 = vadd.f32 %v1587, %v1704
    %v1706 = vpop.f32.mrf.mxu0
    %1707 = vmatprep.mubr.f32.mxu0 0.0
    %1708 = vmatmul.mubr.f32.gmra.mxu0 %v1608
    %v1709 = vpop.f32.mrf.mxu0
    %v1710 = vadd.f32 %v1587, %v1709
    %v1711 = vpop.f32.mrf.mxu0
    %1712 = vmatprep.mubr.f32.mxu0 0.0
    %1713 = vmatmul.mubr.f32.gmra.mxu0 %v1611
    %v1714 = vpop.f32.mrf.mxu0
    %v1715 = vadd.f32 %v1587, %v1714
    %v1716 = vpop.f32.mrf.mxu0
    %1717 = vdwg.mxu0
    %v1718 = vtanh.pop %v1680
    %v1719 = vtanh.pop %v1685
    %v1720 = vtanh.pop %v1690
    %v1721 = vtanh.pop %v1695
    %v1722 = vtanh.pop %v1700
    %v1723 = vtanh.pop %v1705
    %v1724 = vtanh.pop %v1710
    %v1725 = vtanh.pop %v1715
    %v1726 = vld [vmem:[%s10] sm:$0x1]
    %v1728 = vlaneseq
    %v1729 = vshrl.u32 %v1728, 7
    %v1730 = vsub.s32 0, %v1729
    %v1731 = vrot.slane %v1726, %v1730
    %v1733 = vmul.f32 %v1718, %v1731
    %v1734 = vmul.f32 %v1719, %v1731
    %v1735 = vmul.f32 %v1720, %v1731
    %v1736 = vmul.f32 %v1721, %v1731
    %v1737 = vmul.f32 %v1722, %v1731
    %v1738 = vmul.f32 %v1723, %v1731
    %v1739 = vmul.f32 %v1724, %v1731
    %v1740 = vmul.f32 %v1725, %v1731
    %v1741 = vsel %vm254, %v1733, 0.0
    %1742 = vadd.xlane.f32.xlu0 %v1741
    %v1743 = vpop.xlane.xlu0 %1742
    %v1744 = vsel %vm254, %v1734, 0.0
    %1745 = vadd.xlane.f32.xlu0 %v1744
    %v1746 = vpop.xlane.xlu0 %1745
    %v1747 = vsel %vm254, %v1735, 0.0
    %1748 = vadd.xlane.f32.xlu0 %v1747
    %v1749 = vpop.xlane.xlu0 %1748
    %v1750 = vsel %vm254, %v1736, 0.0
    %1751 = vadd.xlane.f32.xlu0 %v1750
    %v1752 = vpop.xlane.xlu0 %1751
    %v1753 = vsel %vm254, %v1737, 0.0
    %1754 = vadd.xlane.f32.xlu0 %v1753
    %v1755 = vpop.xlane.xlu0 %1754
    %v1756 = vsel %vm254, %v1738, 0.0
    %1757 = vadd.xlane.f32.xlu0 %v1756
    %v1758 = vpop.xlane.xlu0 %1757
    %v1759 = vsel %vm254, %v1739, 0.0
    %1760 = vadd.xlane.f32.xlu0 %v1759
    %v1761 = vpop.xlane.xlu0 %1760
    %v1762 = vsel %vm254, %v1740, 0.0
    %1763 = vadd.xlane.f32.xlu0 %v1762
    %v1764 = vpop.xlane.xlu0 %1763
    %s1765 = sld [smem:[#allocation2]]
    %v1766 = vstv %s1765
    %v1767 = vadd.f32 %v1743, %v1766
    %v1768 = vadd.f32 %v1746, %v1766
    %v1769 = vadd.f32 %v1749, %v1766
    %v1770 = vadd.f32 %v1752, %v1766
    %v1771 = vadd.f32 %v1755, %v1766
    %v1772 = vadd.f32 %v1758, %v1766
    %v1773 = vadd.f32 %v1761, %v1766
    %v1774 = vadd.f32 %v1764, %v1766
    %v1783 = vlaneseq
    %v1784 = vshrl.u32 %v1783, 7
    %v1785 = vsub.s32 %v55, %v1784
    %v1786 = vrot.slane %v1767, %v1785
    %v1787 = vlaneseq
    %v1788 = vshrl.u32 %v1787, 7
    %v1789 = vsub.s32 %v55, %v1788
    %v1790 = vrot.slane %v1768, %v1789
    %v1791 = vlaneseq
    %v1792 = vshrl.u32 %v1791, 7
    %v1793 = vsub.s32 %v55, %v1792
    %v1794 = vrot.slane %v1769, %v1793
    %v1795 = vlaneseq
    %v1796 = vshrl.u32 %v1795, 7
    %v1797 = vsub.s32 %v55, %v1796
    %v1798 = vrot.slane %v1770, %v1797
    %v1799 = vlaneseq
    %v1800 = vshrl.u32 %v1799, 7
    %v1801 = vsub.s32 %v55, %v1800
    %v1802 = vrot.slane %v1771, %v1801
    %v1803 = vlaneseq
    %v1804 = vshrl.u32 %v1803, 7
    %v1805 = vsub.s32 %v55, %v1804
    %v1806 = vrot.slane %v1772, %v1805
    %v1807 = vlaneseq
    %v1808 = vshrl.u32 %v1807, 7
    %v1809 = vsub.s32 %v55, %v1808
    %v1810 = vrot.slane %v1773, %v1809
    %v1811 = vlaneseq
    %v1812 = vshrl.u32 %v1811, 7
    %v1813 = vsub.s32 %v55, %v1812
    %v1814 = vrot.slane %v1774, %v1813
    %vm1815 = vcmask 1041409
    %v1816 = vsel %vm1815, %v1790, %v1786
    %vm1817 = vcmask 1042434
    %v1818 = vsel %vm1817, %v1794, %v1816
    %vm1819 = vcmask 1043459
    %v1820 = vsel %vm1819, %v1798, %v1818
    %vm1821 = vcmask 1044484
    %v1822 = vsel %vm1821, %v1802, %v1820
    %vm1823 = vcmask 1045509
    %v1824 = vsel %vm1823, %v1806, %v1822
    %vm1825 = vcmask 1046534
    %v1826 = vsel %vm1825, %v1810, %v1824
    %vm1827 = vcmask 1047559
    %v1828 = vsel %vm1827, %v1814, %v1826
    %vm1830 = vcmask 64512
    %v1831 = vsel %vm1830, %v1828, -inf
    %1832 = vmax.xlane.f32.xlu0 %v1831
    %v1833 = vpop.xlane.xlu0 %1832
    %v1835 = vlaneseq
    %v1836 = vshrl.u32 %v1835, 7
    %v1837 = vsub.s32 0, %v1836
    %v1838 = vrot.slane %v1833, %v1837
    %v1839 = vlaneseq
    %v1840 = vshrl.u32 %v1839, 7
    %v1841 = vsub.s32 1, %v1840
    %v1842 = vrot.slane %v1833, %v1841
    %v1843 = vlaneseq
    %v1844 = vshrl.u32 %v1843, 7
    %v1845 = vsub.s32 2, %v1844
    %v1846 = vrot.slane %v1833, %v1845
    %v1847 = vlaneseq
    %v1848 = vshrl.u32 %v1847, 7
    %v1849 = vsub.s32 3, %v1848
    %v1850 = vrot.slane %v1833, %v1849
    %v1851 = vlaneseq
    %v1852 = vshrl.u32 %v1851, 7
    %v1853 = vsub.s32 4, %v1852
    %v1854 = vrot.slane %v1833, %v1853
    %v1855 = vlaneseq
    %v1856 = vshrl.u32 %v1855, 7
    %v1857 = vsub.s32 5, %v1856
    %v1858 = vrot.slane %v1833, %v1857
    %v1859 = vlaneseq
    %v1860 = vshrl.u32 %v1859, 7
    %v1861 = vsub.s32 6, %v1860
    %v1862 = vrot.slane %v1833, %v1861
    %v1863 = vlaneseq
    %v1864 = vshrl.u32 %v1863, 7
    %v1865 = vsub.s32 7, %v1864
    %v1866 = vrot.slane %v1833, %v1865
    %v1875 = vsub.f32 %v1767, %v1838
    %v1876 = vsub.f32 %v1768, %v1842
    %v1877 = vsub.f32 %v1769, %v1846
    %v1878 = vsub.f32 %v1770, %v1850
    %v1879 = vsub.f32 %v1771, %v1854
    %v1880 = vsub.f32 %v1772, %v1858
    %v1881 = vsub.f32 %v1773, %v1862
    %v1882 = vsub.f32 %v1774, %v1866
    %v1883 = vmul.f32 %v1875, 1.442695
    %v1884 = vpow.pop %v1883
    %v1885 = vmul.f32 %v1876, 1.442695
    %v1886 = vpow.pop %v1885
    %v1887 = vmul.f32 %v1877, 1.442695
    %v1888 = vpow.pop %v1887
    %v1889 = vmul.f32 %v1878, 1.442695
    %v1890 = vpow.pop %v1889
    %v1891 = vmul.f32 %v1879, 1.442695
    %v1892 = vpow.pop %v1891
    %v1893 = vmul.f32 %v1880, 1.442695
    %v1894 = vpow.pop %v1893
    %v1895 = vmul.f32 %v1881, 1.442695
    %v1896 = vpow.pop %v1895
    %v1897 = vmul.f32 %v1882, 1.442695
    %v1898 = vpow.pop %v1897
    %1907 = vset.pattern.permute.xlu0 0
    %1908 = vperm.xlu0 %1907, %v1884
    %v1909 = vpop.permute.xlu0 %1908
    %1910 = vset.pattern.permute.xlu0 0
    %1911 = vperm.xlu0 %1910, %v1886
    %v1912 = vpop.permute.xlu0 %1911
    %1913 = vset.pattern.permute.xlu0 0
    %1914 = vperm.xlu0 %1913, %v1888
    %v1915 = vpop.permute.xlu0 %1914
    %1916 = vset.pattern.permute.xlu0 0
    %1917 = vperm.xlu0 %1916, %v1890
    %v1918 = vpop.permute.xlu0 %1917
    %1919 = vset.pattern.permute.xlu0 0
    %1920 = vperm.xlu0 %1919, %v1892
    %v1921 = vpop.permute.xlu0 %1920
    %1922 = vset.pattern.permute.xlu0 0
    %1923 = vperm.xlu0 %1922, %v1894
    %v1924 = vpop.permute.xlu0 %1923
    %1925 = vset.pattern.permute.xlu0 0
    %1926 = vperm.xlu0 %1925, %v1896
    %v1927 = vpop.permute.xlu0 %1926
    %1928 = vset.pattern.permute.xlu0 0
    %1929 = vperm.xlu0 %1928, %v1898
    %v1930 = vpop.permute.xlu0 %1929
    %v1931 = vlaneseq
    %v1932 = vshrl.u32 %v1931, 7
    %v1933 = vsub.s32 %v55, %v1932
    %v1934 = vrot.slane %v1909, %v1933
    %v1935 = vlaneseq
    %v1936 = vshrl.u32 %v1935, 7
    %v1937 = vsub.s32 %v55, %v1936
    %v1938 = vrot.slane %v1912, %v1937
    %v1939 = vlaneseq
    %v1940 = vshrl.u32 %v1939, 7
    %v1941 = vsub.s32 %v55, %v1940
    %v1942 = vrot.slane %v1915, %v1941
    %v1943 = vlaneseq
    %v1944 = vshrl.u32 %v1943, 7
    %v1945 = vsub.s32 %v55, %v1944
    %v1946 = vrot.slane %v1918, %v1945
    %v1947 = vlaneseq
    %v1948 = vshrl.u32 %v1947, 7
    %v1949 = vsub.s32 %v55, %v1948
    %v1950 = vrot.slane %v1921, %v1949
    %v1951 = vlaneseq
    %v1952 = vshrl.u32 %v1951, 7
    %v1953 = vsub.s32 %v55, %v1952
    %v1954 = vrot.slane %v1924, %v1953
    %v1955 = vlaneseq
    %v1956 = vshrl.u32 %v1955, 7
    %v1957 = vsub.s32 %v55, %v1956
    %v1958 = vrot.slane %v1927, %v1957
    %v1959 = vlaneseq
    %v1960 = vshrl.u32 %v1959, 7
    %v1961 = vsub.s32 %v55, %v1960
    %v1962 = vrot.slane %v1930, %v1961
    %v1963 = vsel %vm1815, %v1938, %v1934
    %v1964 = vsel %vm1817, %v1942, %v1963
    %v1965 = vsel %vm1819, %v1946, %v1964
    %v1966 = vsel %vm1821, %v1950, %v1965
    %v1967 = vsel %vm1823, %v1954, %v1966
    %v1968 = vsel %vm1825, %v1958, %v1967
    %v1969 = vsel %vm1827, %v1962, %v1968
    %v1971 = vsel %vm1830, %v1969, 0.0
    %1972 = vadd.xlane.f32.xlu0 %v1971
    %v1973 = vpop.xlane.xlu0 %1972
    %v1975 = vlaneseq
    %v1976 = vshrl.u32 %v1975, 7
    %v1977 = vsub.s32 0, %v1976
    %v1978 = vrot.slane %v1973, %v1977
    %v1979 = vlaneseq
    %v1980 = vshrl.u32 %v1979, 7
    %v1981 = vsub.s32 1, %v1980
    %v1982 = vrot.slane %v1973, %v1981
    %v1983 = vlaneseq
    %v1984 = vshrl.u32 %v1983, 7
    %v1985 = vsub.s32 2, %v1984
    %v1986 = vrot.slane %v1973, %v1985
    %v1987 = vlaneseq
    %v1988 = vshrl.u32 %v1987, 7
    %v1989 = vsub.s32 3, %v1988
    %v1990 = vrot.slane %v1973, %v1989
    %v1991 = vlaneseq
    %v1992 = vshrl.u32 %v1991, 7
    %v1993 = vsub.s32 4, %v1992
    %v1994 = vrot.slane %v1973, %v1993
    %v1995 = vlaneseq
    %v1996 = vshrl.u32 %v1995, 7
    %v1997 = vsub.s32 5, %v1996
    %v1998 = vrot.slane %v1973, %v1997
    %v1999 = vlaneseq
    %v2000 = vshrl.u32 %v1999, 7
    %v2001 = vsub.s32 6, %v2000
    %v2002 = vrot.slane %v1973, %v2001
    %v2003 = vlaneseq
    %v2004 = vshrl.u32 %v2003, 7
    %v2005 = vsub.s32 7, %v2004
    %v2006 = vrot.slane %v1973, %v2005
    %v2015 = vrcp.pop %v1978
    %v2016 = vmul.f32 %v1884, %v2015
    %v2017 = vrcp.pop %v1982
    %v2018 = vmul.f32 %v1886, %v2017
    %v2019 = vrcp.pop %v1986
    %v2020 = vmul.f32 %v1888, %v2019
    %v2021 = vrcp.pop %v1990
    %v2022 = vmul.f32 %v1890, %v2021
    %v2023 = vrcp.pop %v1994
    %v2024 = vmul.f32 %v1892, %v2023
    %v2025 = vrcp.pop %v1998
    %v2026 = vmul.f32 %v1894, %v2025
    %v2027 = vrcp.pop %v2002
    %v2028 = vmul.f32 %v1896, %v2027
    %v2029 = vrcp.pop %v2006
    %v2030 = vmul.f32 %v1898, %v2029
    %2039 = vset.pattern.permute.xlu0 0
    %2040 = vperm.xlu0 %2039, %v2016
    %v2041 = vpop.permute.xlu0 %2040
    %2042 = vset.pattern.permute.xlu0 0
    %2043 = vperm.xlu0 %2042, %v2018
    %v2044 = vpop.permute.xlu0 %2043
    %2045 = vset.pattern.permute.xlu0 0
    %2046 = vperm.xlu0 %2045, %v2020
    %v2047 = vpop.permute.xlu0 %2046
    %2048 = vset.pattern.permute.xlu0 0
    %2049 = vperm.xlu0 %2048, %v2022
    %v2050 = vpop.permute.xlu0 %2049
    %2051 = vset.pattern.permute.xlu0 0
    %2052 = vperm.xlu0 %2051, %v2024
    %v2053 = vpop.permute.xlu0 %2052
    %2054 = vset.pattern.permute.xlu0 0
    %2055 = vperm.xlu0 %2054, %v2026
    %v2056 = vpop.permute.xlu0 %2055
    %2057 = vset.pattern.permute.xlu0 0
    %2058 = vperm.xlu0 %2057, %v2028
    %v2059 = vpop.permute.xlu0 %2058
    %2060 = vset.pattern.permute.xlu0 0
    %2061 = vperm.xlu0 %2060, %v2030
    %v2062 = vpop.permute.xlu0 %2061
    %v2063 = vlaneseq
    %v2064 = vshrl.u32 %v2063, 7
    %v2065 = vsub.s32 %v55, %v2064
    %v2066 = vrot.slane %v2041, %v2065
    %v2067 = vlaneseq
    %v2068 = vshrl.u32 %v2067, 7
    %v2069 = vsub.s32 %v55, %v2068
    %v2070 = vrot.slane %v2044, %v2069
    %v2071 = vlaneseq
    %v2072 = vshrl.u32 %v2071, 7
    %v2073 = vsub.s32 %v55, %v2072
    %v2074 = vrot.slane %v2047, %v2073
    %v2075 = vlaneseq
    %v2076 = vshrl.u32 %v2075, 7
    %v2077 = vsub.s32 %v55, %v2076
    %v2078 = vrot.slane %v2050, %v2077
    %v2079 = vlaneseq
    %v2080 = vshrl.u32 %v2079, 7
    %v2081 = vsub.s32 %v55, %v2080
    %v2082 = vrot.slane %v2053, %v2081
    %v2083 = vlaneseq
    %v2084 = vshrl.u32 %v2083, 7
    %v2085 = vsub.s32 %v55, %v2084
    %v2086 = vrot.slane %v2056, %v2085
    %v2087 = vlaneseq
    %v2088 = vshrl.u32 %v2087, 7
    %v2089 = vsub.s32 %v55, %v2088
    %v2090 = vrot.slane %v2059, %v2089
    %v2091 = vlaneseq
    %v2092 = vshrl.u32 %v2091, 7
    %v2093 = vsub.s32 %v55, %v2092
    %v2094 = vrot.slane %v2062, %v2093
    %v2095 = vsel %vm1815, %v2070, %v2066
    %v2096 = vsel %vm1817, %v2074, %v2095
    %v2097 = vsel %vm1819, %v2078, %v2096
    %v2098 = vsel %vm1821, %v2082, %v2097
    %v2099 = vsel %vm1823, %v2086, %v2098
    %v2100 = vsel %vm1825, %v2090, %v2099
    %v2101 = vsel %vm1827, %v2094, %v2100
    %2103 = vst.msk [vmem:[#allocation5] sm:$0xff] %vm1830, %v2101
    %v2112 = vmul.f32 %v1570, %v2041
    %v2113 = vmul.f32 %v1571, %v2044
    %v2114 = vmul.f32 %v1572, %v2047
    %v2115 = vmul.f32 %v1573, %v2050
    %v2116 = vmul.f32 %v1574, %v2053
    %v2117 = vmul.f32 %v1575, %v2056
    %v2118 = vmul.f32 %v1576, %v2059
    %v2119 = vmul.f32 %v1577, %v2062
    %v2120 = vsel %vm395, %v2112, 0.0
    %v2121 = vrot.slane %v2120, 4
    %v2122 = vadd.f32 %v2120, %v2121
    %v2123 = vrot.slane %v2122, 2
    %v2124 = vadd.f32 %v2122, %v2123
    %v2125 = vrot.slane %v2124, 1
    %v2126 = vadd.f32 %v2124, %v2125
    %v2127 = vsel %vm395, %v2113, 0.0
    %v2128 = vrot.slane %v2127, 4
    %v2129 = vadd.f32 %v2127, %v2128
    %v2130 = vrot.slane %v2129, 2
    %v2131 = vadd.f32 %v2129, %v2130
    %v2132 = vrot.slane %v2131, 1
    %v2133 = vadd.f32 %v2131, %v2132
    %v2134 = vsel %vm395, %v2114, 0.0
    %v2135 = vrot.slane %v2134, 4
    %v2136 = vadd.f32 %v2134, %v2135
    %v2137 = vrot.slane %v2136, 2
    %v2138 = vadd.f32 %v2136, %v2137
    %v2139 = vrot.slane %v2138, 1
    %v2140 = vadd.f32 %v2138, %v2139
    %v2141 = vsel %vm395, %v2115, 0.0
    %v2142 = vrot.slane %v2141, 4
    %v2143 = vadd.f32 %v2141, %v2142
    %v2144 = vrot.slane %v2143, 2
    %v2145 = vadd.f32 %v2143, %v2144
    %v2146 = vrot.slane %v2145, 1
    %v2147 = vadd.f32 %v2145, %v2146
    %v2148 = vsel %vm395, %v2116, 0.0
    %v2149 = vrot.slane %v2148, 4
    %v2150 = vadd.f32 %v2148, %v2149
    %v2151 = vrot.slane %v2150, 2
    %v2152 = vadd.f32 %v2150, %v2151
    %v2153 = vrot.slane %v2152, 1
    %v2154 = vadd.f32 %v2152, %v2153
    %v2155 = vsel %vm395, %v2117, 0.0
    %v2156 = vrot.slane %v2155, 4
    %v2157 = vadd.f32 %v2155, %v2156
    %v2158 = vrot.slane %v2157, 2
    %v2159 = vadd.f32 %v2157, %v2158
    %v2160 = vrot.slane %v2159, 1
    %v2161 = vadd.f32 %v2159, %v2160
    %v2162 = vsel %vm395, %v2118, 0.0
    %v2163 = vrot.slane %v2162, 4
    %v2164 = vadd.f32 %v2162, %v2163
    %v2165 = vrot.slane %v2164, 2
    %v2166 = vadd.f32 %v2164, %v2165
    %v2167 = vrot.slane %v2166, 1
    %v2168 = vadd.f32 %v2166, %v2167
    %v2169 = vsel %vm395, %v2119, 0.0
    %v2170 = vrot.slane %v2169, 4
    %v2171 = vadd.f32 %v2169, %v2170
    %v2172 = vrot.slane %v2171, 2
    %v2173 = vadd.f32 %v2171, %v2172
    %v2174 = vrot.slane %v2173, 1
    %v2175 = vadd.f32 %v2173, %v2174
    %v2184 = vsel %vm1815, %v2133, %v2126
    %v2185 = vsel %vm1817, %v2140, %v2184
    %v2186 = vsel %vm1819, %v2147, %v2185
    %v2187 = vsel %vm1821, %v2154, %v2186
    %v2188 = vsel %vm1823, %v2161, %v2187
    %v2189 = vsel %vm1825, %v2168, %v2188
    %v2190 = vsel %vm1827, %v2175, %v2189
    %2192 = vst.msk [vmem:[#allocation3] sm:$0xff] %vm395, %v2190
    // Predicated region
    $region50: #{word_attn_net.1} parent=1 // pred_check
      _
    $region51: #{word_attn_net.1} parent=1 // pred_check_branch
      %2194 = sbr.rel (0) target = $region53
    $region52: #{word_attn_net.1} parent=1 // pred_region
      %s2196 = ssub.s32 128, 128
      %2197 = vsyncadd [#allocation4], %s2196
      %s2199 = sshll.u32 [#allocation3], 4
      %s2200 = int_to_ptr.vmem [resolvable:$true] %s2199
      %2202 = dma.vmem_to_hbm [thread:$0]  %s2200, 128, %s12, [#allocation4]
    $region53: #{word_attn_net.1} parent=1 // pred_fallthru
      _
    // Predicated region
    $region54: #{word_attn_net.1} parent=1 // pred_check
      _
    $region55: #{word_attn_net.1} parent=1 // pred_check_branch
      %2204 = sbr.rel (0) target = $region57
    $region56: #{word_attn_net.1} parent=1 // pred_region
      %s2206 = ssub.s32 128, 128
      %2207 = vsyncadd [#allocation6], %s2206
      %s2209 = sshll.u32 [#allocation5], 4
      %s2210 = int_to_ptr.vmem [resolvable:$true] %s2209
      %2212 = dma.vmem_to_hbm [thread:$0]  %s2210, 128, %s13, [#allocation6]
    $region57: #{word_attn_net.1} parent=1 // pred_fallthru
      _
    // Predicated region
    $region58: #{word_attn_net.1} parent=1 // pred_check
      _
    $region59: #{word_attn_net.1} parent=1 // pred_check_branch
      %2214 = sbr.rel (0) target = $region61
    $region60: #{word_attn_net.1} parent=1 // pred_region
      %2215 = dma.done [#allocation4], 128
    $region61: #{word_attn_net.1} parent=1 // pred_fallthru
      _
    // Predicated region
    $region62: #{word_attn_net.1} parent=1 // pred_check
      _
    $region63: #{word_attn_net.1} parent=1 // pred_check_branch
      %2217 = sbr.rel (0) target = $region65
    $region64: #{word_attn_net.1} parent=1 // pred_region
      %2218 = dma.done [#allocation6], 128
    $region65: #{word_attn_net.1} parent=1 // pred_fallthru
      _
    %2219 = vsyncpa [#allocation4], 1
    %2220 = vsyncpa [#allocation6], 1

</llo_original>
